<compile_context>
chip_gen: v5e
topology: v5e:2x2
jax: 0.10.0
libtpu: 0.0.40
codegen_flags: <defaults>
</compile_context>

<pallas_src>
import functools

import jax
import jax.numpy as jnp
from jax import lax
from jax.experimental import pallas as pl
from jax.experimental.pallas import tpu as pltpu


def _basicblock_kernel(x_ref, was_ref, wam_ref, ba_ref, wbs_ref, wbm_ref,
                       bb_ref, out_ref, pad_ref, col_ref,
                       *, H, W, HW, HWP, PAD):
    """Fused BasicBlock, one batch element per grid step.

    x_ref   : (1, C, HWP)        input (residual comes from the same tile)
    was_ref : (C, 6*C)           conv_a weights, dw!=0 taps, BN_a scale folded
    wam_ref : (3, C, C)          conv_a weights, dw==0 taps (dh=-1,0,1)
    ba_ref  : (C, 1)             BN_a shift (f32)
    wbs_ref : (C, 6*C)           conv_b weights, dw!=0 taps, BN_b scale folded
    wbm_ref : (3, C, C)          conv_b weights, dw==0 taps (dh=-1,0,1)
    bb_ref  : (C, 1)             BN_b shift (f32)
    out_ref : (1, C, HWP)
    pad_ref : (C, PAD+HWP+PAD)   VMEM scratch: zero-haloed activation (compute dtype)
    col_ref : (6*C, HWP)         VMEM scratch: im2col of the 6 dw!=0 taps
    """
    C = x_ref.shape[1]
    cdt = pad_ref.dtype

    # Zero only the halo stripes.  Re-done every grid step so the kernel
    # carries no cross-step state (megacore-safe with "parallel" batch axis).
    pad_ref[:, :PAD] = jnp.zeros((C, PAD), cdt)
    pad_ref[:, PAD + HWP:] = jnp.zeros((C, PAD), cdt)

    # Hoisted horizontal-wrap masks: computed ONCE per step, one compare each,
    # reused for all 12 masked taps of both convs, shared zero constant.
    w_pos = lax.broadcasted_iota(jnp.int32, (C, HWP), 1) % W
    mask_m = w_pos > 0            # valid lanes for dw = -1
    mask_p = w_pos < (W - 1)      # valid lanes for dw = +1
    zero = jnp.zeros((C, HWP), cdt)

    taps_side = [(dh, dw) for dh in (-1, 0, 1) for dw in (-1, 1)]

    def store_activation(src):
        # src: (C, HWP) in compute dtype -> haloed copy in pad_ref.
        pad_ref[:, PAD:PAD + HWP] = src
        if HWP > HW:
            # Keep the lane-padding stripe zero so dh=+1 taps of the last
            # image row read zeros rather than junk lanes.
            pad_ref[:, PAD + HW:PAD + HWP] = jnp.zeros((C, HWP - HW), cdt)

    def build_cols():
        # Only the 6 dw != 0 taps are materialized; the dw == 0 taps are read
        # straight out of pad_ref by `conv` below.
        for s, (dh, dw) in enumerate(taps_side):
            d = dh * W + dw
            tap = pad_ref[:, PAD + d:PAD + d + HWP]     # lane-offset load
            m = mask_m if dw < 0 else mask_p
            col_ref[s * C:(s + 1) * C, :] = jnp.where(m, tap, zero)

    def conv(ws_ref, wm_ref):
        acc = jnp.dot(ws_ref[...], col_ref[...],
                      preferred_element_type=jnp.float32)
        for k, dh in enumerate((-1, 0, 1)):
            rhs = pad_ref[:, PAD + dh * W:PAD + dh * W + HWP]
            acc = acc + jnp.dot(wm_ref[k], rhs,
                                preferred_element_type=jnp.float32)
        return acc                                       # (C, HWP) f32

    # ---- conv_a (3x3, pad=1) + folded bn_a + ReLU ----
    store_activation(x_ref[0].astype(cdt))
    build_cols()
    a = jnp.maximum(conv(was_ref, wam_ref) + ba_ref[...], 0.0)

    # ---- conv_b (3x3, pad=1) + folded bn_b + residual add + ReLU ----
    store_activation(a.astype(cdt))          # bias+ReLU+cast fused into store
    build_cols()
    b = conv(wbs_ref, wbm_ref) + bb_ref[...]
    out = jnp.maximum(b + x_ref[0].astype(jnp.float32), 0.0)
    out_ref[0] = out.astype(out_ref.dtype)


def _fold_bn_weights(w, inv, compute_dtype):
    """w: (O, I, 3, 3) OIHW -> (w_side (O, 6I), w_mid (3, O, I)), BN scale folded.

    Tap order matches the kernel: w_side columns are tap-major over
    (dh, dw) in [(-1,-1),(-1,1),(0,-1),(0,1),(1,-1),(1,1)], channel-minor;
    w_mid[k] is the dh = (-1, 0, 1)[k], dw = 0 tap.
    """
    O, I = w.shape[0], w.shape[1]
    w_t = jnp.transpose(w, (0, 2, 3, 1))                     # (O, kh, kw, I)
    w_side = w_t[:, :, [0, 2], :].reshape(O, 6 * I)          # dw != 0 taps
    w_mid = jnp.transpose(w_t[:, :, 1, :], (1, 0, 2))        # (3, O, I)
    w_side = (w_side * inv[:, None]).astype(compute_dtype)
    w_mid = (w_mid * inv[None, :, None]).astype(compute_dtype)
    return w_side, w_mid


@functools.partial(jax.jit, static_argnames=('eps', 'compute_dtype'))
def resnet_basicblock(x_nchw, w_a, gamma_a, beta_a, mean_a, var_a,
                      w_b, gamma_b, beta_b, mean_b, var_b,
                      eps=1e-5, compute_dtype=jnp.bfloat16):
    """ResNetBasicblock forward (stride=1, downsample=None).

    x_nchw: (N, C, H, W);  w_a/w_b: (C, C, 3, 3) OIHW.  Returns (N, C, H, W).
    """
    N, Cin, H, W = x_nchw.shape
    Cout = w_a.shape[0]
    assert Cin == Cout, "identity residual requires inplanes == planes"
    HW = H * W
    HWP = ((HW + 127) // 128) * 128           # lane-dense pixel axis
    PAD = ((W + 1 + 127) // 128) * 128        # lane-aligned halo
    assert PAD >= W + 1                       # corner taps must stay in-bounds

    dt = x_nchw.dtype
    cdt = jnp.dtype(compute_dtype)

    x2 = x_nchw.reshape(N, Cin, HW)           # free reshape, no transpose
    if HWP != HW:
        x2 = jnp.pad(x2, ((0, 0), (0, 0), (0, HWP - HW)))

    # Fold BN (inference form) scale into the conv weights; keep only shift.
    inv_a = gamma_a / jnp.sqrt(var_a + eps)
    inv_b = gamma_b / jnp.sqrt(var_b + eps)
    was, wam = _fold_bn_weights(w_a, inv_a, cdt)
    wbs, wbm = _fold_bn_weights(w_b, inv_b, cdt)
    shift_a = (beta_a - mean_a * inv_a).reshape(Cout, 1).astype(jnp.float32)
    shift_b = (beta_b - mean_b * inv_b).reshape(Cout, 1).astype(jnp.float32)

    # Explicit VMEM budget (v5e's default scoped limit is only 16 MiB).
    item = jnp.dtype(dt).itemsize
    citem = cdt.itemsize
    per_step = (
        2 * 2 * Cin * HWP * item                              # x/out double bufs
        + 2 * 2 * (6 * Cout * Cin + 3 * Cout * Cin) * citem   # weights, 2 bufs
        + 2 * 2 * Cout * 4                                    # BN shifts
        + Cin * (PAD + HWP + PAD) * citem                     # pad scratch
        + 6 * Cin * HWP * citem)                              # col scratch
    vmem_limit = int(min(100 * 1024 * 1024,
                         max(32 * 1024 * 1024, 2 * per_step)))

    kernel = functools.partial(_basicblock_kernel,
                               H=H, W=W, HW=HW, HWP=HWP, PAD=PAD)

    out2 = pl.pallas_call(
        kernel,
        out_shape=jax.ShapeDtypeStruct((N, Cout, HWP), dt),
        grid=(N,),
        in_specs=[
            pl.BlockSpec((1, Cin, HWP), lambda n: (n, 0, 0)),
            pl.BlockSpec((Cout, 6 * Cin), lambda n: (0, 0)),
            pl.BlockSpec((3, Cout, Cin), lambda n: (0, 0, 0)),
            pl.BlockSpec((Cout, 1), lambda n: (0, 0)),
            pl.BlockSpec((Cout, 6 * Cout), lambda n: (0, 0)),
            pl.BlockSpec((3, Cout, Cout), lambda n: (0, 0, 0)),
            pl.BlockSpec((Cout, 1), lambda n: (0, 0)),
        ],
        out_specs=pl.BlockSpec((1, Cout, HWP), lambda n: (n, 0, 0)),
        scratch_shapes=[
            pltpu.VMEM((Cin, PAD + HWP + PAD), cdt),
            pltpu.VMEM((6 * Cin, HWP), cdt),
        ],
        compiler_params=pltpu.CompilerParams(
            # Independent batch iterations shard across TensorCores (v7x).
            dimension_semantics=("parallel",),
            vmem_limit_bytes=vmem_limit),
    )(x2, was, wam, shift_a, wbs, wbm, shift_b)

    if HWP != HW:
        out2 = out2[..., :HW]
    return out2.reshape(N, Cout, H, W)


def _reference(x_nchw, w_a, gamma_a, beta_a, mean_a, var_a,
               w_b, gamma_b, beta_b, mean_b, var_b, eps=1e-5):
    """Pure-JAX reference (lax conv) mirroring the PyTorch forward."""
    def conv(x, w):
        return lax.conv_general_dilated(
            x, w, window_strides=(1, 1), padding=((1, 1), (1, 1)),
            dimension_numbers=('NCHW', 'OIHW', 'NCHW'))

    def bn(x, g, b, m, v):
        g = g.reshape(1, -1, 1, 1)
        b = b.reshape(1, -1, 1, 1)
        m = m.reshape(1, -1, 1, 1)
        v = v.reshape(1, -1, 1, 1)
        return (x - m) / jnp.sqrt(v + eps) * g + b

    h = jax.nn.relu(bn(conv(x_nchw, w_a), gamma_a, beta_a, mean_a, var_a))
    h = bn(conv(h, w_b), gamma_b, beta_b, mean_b, var_b)
    return jax.nn.relu(x_nchw + h)


if __name__ == "__main__":
    key = jax.random.PRNGKey(0)
    N, C, H, W = 2, 4, 16, 16          # inplanes = planes = 4, stride = 1
    k_x, k_wa, k_wb, k_ma, k_va, k_mb, k_vb = jax.random.split(key, 7)

    x = jax.random.normal(k_x, (N, C, H, W), jnp.float32)

    # Deterministic parameter init (shapes per nn.Conv2d / nn.BatchNorm2d).
    w_a = jax.random.normal(k_wa, (C, C, 3, 3), jnp.float32) * 0.1
    w_b = jax.random.normal(k_wb, (C, C, 3, 3), jnp.float32) * 0.1
    gamma_a = jnp.ones((C,), jnp.float32)
    beta_a = jnp.zeros((C,), jnp.float32)
    mean_a = jax.random.normal(k_ma, (C,), jnp.float32) * 0.05
    var_a = jnp.abs(jax.random.normal(k_va, (C,), jnp.float32)) * 0.1 + 1.0
    gamma_b = jnp.ones((C,), jnp.float32)
    beta_b = jnp.zeros((C,), jnp.float32)
    mean_b = jax.random.normal(k_mb, (C,), jnp.float32) * 0.05
    var_b = jnp.abs(jax.random.normal(k_vb, (C,), jnp.float32)) * 0.1 + 1.0

    args = (x, w_a, gamma_a, beta_a, mean_a, var_a,
            w_b, gamma_b, beta_b, mean_b, var_b)

    ref = _reference(*args)

    # f32 MXU path: tight check of the kernel's structural correctness.
    out_f32 = jax.block_until_ready(
        resnet_basicblock(*args, compute_dtype=jnp.float32))
    assert out_f32.shape == (N, C, H, W)
    assert jnp.allclose(out_f32, ref, atol=2e-3, rtol=2e-3), (
        f"f32 path max abs err {jnp.max(jnp.abs(out_f32 - ref))}")

    # bf16 MXU path (default, peak-throughput): f32 accumulation/residual.
    out_bf16 = jax.block_until_ready(
        resnet_basicblock(*args, compute_dtype=jnp.bfloat16))
    assert out_bf16.shape == (N, C, H, W)
    assert jnp.allclose(out_bf16, ref, atol=3e-2, rtol=3e-2), (
        f"bf16 path max abs err {jnp.max(jnp.abs(out_bf16 - ref))}")

    print("KERNEL_OK")
</pallas_src>

<mosaic_0001>
module attributes {stable_mosaic.version = 11 : i64} {
  func.func @_basicblock_kernel(%arg0: i32, %arg1: memref<1x4x256xf32, #tpu.memory_space<vmem>>, %arg2: memref<4x24xf32, #tpu.memory_space<vmem>>, %arg3: memref<3x4x4xf32, #tpu.memory_space<vmem>>, %arg4: memref<4x1xf32, #tpu.memory_space<vmem>>, %arg5: memref<4x24xf32, #tpu.memory_space<vmem>>, %arg6: memref<3x4x4xf32, #tpu.memory_space<vmem>>, %arg7: memref<4x1xf32, #tpu.memory_space<vmem>>, %arg8: memref<1x4x256xf32, #tpu.memory_space<vmem>>, %arg9: memref<4x512xf32, #tpu.memory_space<vmem>>, %arg10: memref<24x256xf32, #tpu.memory_space<vmem>>) attributes {dimension_semantics = [#tpu.dimension_semantics<parallel>], iteration_bounds = array<i64: 2>, scalar_prefetch = 0 : i64, scratch_operands = 2 : i64, tpu.core_type = #tpu.core_type<tc>, window_params = [{transform_indices = @transform_0, window_bounds = array<i64: 1, 4, 256>}, {pipeline_mode = #tpu.pipeline_mode<synchronous>, transform_indices = @transform_1, window_bounds = array<i64: 4, 24>}, {pipeline_mode = #tpu.pipeline_mode<synchronous>, transform_indices = @transform_2, window_bounds = array<i64: 3, 4, 4>}, {pipeline_mode = #tpu.pipeline_mode<synchronous>, transform_indices = @transform_3, window_bounds = array<i64: 4, 1>}, {pipeline_mode = #tpu.pipeline_mode<synchronous>, transform_indices = @transform_4, window_bounds = array<i64: 4, 24>}, {pipeline_mode = #tpu.pipeline_mode<synchronous>, transform_indices = @transform_5, window_bounds = array<i64: 3, 4, 4>}, {pipeline_mode = #tpu.pipeline_mode<synchronous>, transform_indices = @transform_6, window_bounds = array<i64: 4, 1>}, {transform_indices = @transform_7, window_bounds = array<i64: 1, 4, 256>}]} {
    %cst = arith.constant 0.000000e+00 : f32
    %0 = vector.broadcast %cst : f32 to vector<4x128xf32>
    %c0 = arith.constant 0 : index
    %c0_0 = arith.constant 0 : index
    %1 = vector.load %arg9[%c0, %c0_0] : memref<4x512xf32, #tpu.memory_space<vmem>>, vector<4x128xf32>
    tpu.vector_store %arg9[%c0, %c0_0], %0 {strides = array<i32>} : memref<4x512xf32, #tpu.memory_space<vmem>>, vector<4x128xf32>,
    %cst_1 = arith.constant 0.000000e+00 : f32
    %2 = vector.broadcast %cst_1 : f32 to vector<4x128xf32>
    %c0_2 = arith.constant 0 : index
    %c384 = arith.constant 384 : index
    %3 = vector.load %arg9[%c0_2, %c384] : memref<4x512xf32, #tpu.memory_space<vmem>>, vector<4x128xf32>
    tpu.vector_store %arg9[%c0_2, %c384], %2 {strides = array<i32>} : memref<4x512xf32, #tpu.memory_space<vmem>>, vector<4x128xf32>,
    %4 = tpu.iota {dimensions = array<i32: 1>} : vector<4x256xi32>
    %c16_i32 = arith.constant 16 : i32
    %c0_i32 = arith.constant 0 : i32
    %5 = arith.cmpi eq, %c16_i32, %c0_i32 : i32
    %c1_i32 = arith.constant 1 : i32
    %6 = arith.select %5, %c1_i32, %c16_i32 : i32
    %7 = vector.broadcast %6 : i32 to vector<4x256xi32>
    %8 = arith.remsi %4, %7 : vector<4x256xi32>
    %c0_i32_3 = arith.constant 0 : i32
    %9 = vector.broadcast %c0_i32_3 : i32 to vector<4x256xi32>
    %10 = arith.cmpi ne, %8, %9 : vector<4x256xi32>
    %c0_i32_4 = arith.constant 0 : i32
    %11 = vector.broadcast %c0_i32_4 : i32 to vector<4x256xi32>
    %12 = arith.cmpi slt, %8, %11 : vector<4x256xi32>
    %c0_i32_5 = arith.constant 0 : i32
    %13 = arith.cmpi slt, %6, %c0_i32_5 : i32
    %14 = vector.broadcast %13 : i1 to vector<4x256xi1>
    %15 = vector.broadcast %14 : vector<4x256xi1> to vector<4x256xi1>
    %16 = arith.xori %12, %15 : vector<4x256xi1>
    %17 = arith.andi %16, %10 : vector<4x256xi1>
    %18 = vector.broadcast %6 : i32 to vector<4x256xi32>
    %19 = arith.addi %8, %18 : vector<4x256xi32>
    %20 = arith.select %17, %19, %8 : vector<4x256xi1>, vector<4x256xi32>
    %c0_i32_6 = arith.constant 0 : i32
    %21 = vector.broadcast %c0_i32_6 : i32 to vector<4x256xi32>
    %22 = arith.cmpi sgt, %20, %21 : vector<4x256xi32>
    %c15_i32 = arith.constant 15 : i32
    %23 = vector.broadcast %c15_i32 : i32 to vector<4x256xi32>
    %24 = arith.cmpi slt, %20, %23 : vector<4x256xi32>
    %cst_7 = arith.constant 0.000000e+00 : f32
    %25 = vector.broadcast %cst_7 : f32 to vector<4x256xf32>
    %c0_8 = arith.constant 0 : index
    %c0_9 = arith.constant 0 : index
    %c0_10 = arith.constant 0 : index
    %26 = vector.load %arg1[%c0_8, %c0_9, %c0_10] : memref<1x4x256xf32, #tpu.memory_space<vmem>>, vector<1x4x256xf32>
    %27 = vector.shape_cast %26 : vector<1x4x256xf32> to vector<4x256xf32>
    %c0_11 = arith.constant 0 : index
    %c128 = arith.constant 128 : index
    %28 = vector.load %arg9[%c0_11, %c128] : memref<4x512xf32, #tpu.memory_space<vmem>>, vector<4x256xf32>
    tpu.vector_store %arg9[%c0_11, %c128], %27 {strides = array<i32>} : memref<4x512xf32, #tpu.memory_space<vmem>>, vector<4x256xf32>,
    %c0_12 = arith.constant 0 : index
    %c111 = arith.constant 111 : index
    %29 = vector.load %arg9[%c0_12, %c111] : memref<4x512xf32, #tpu.memory_space<vmem>>, vector<4x256xf32>
    %30 = arith.select %22, %29, %25 : vector<4x256xi1>, vector<4x256xf32>
    %c0_13 = arith.constant 0 : index
    %c0_14 = arith.constant 0 : index
    %31 = vector.load %arg10[%c0_13, %c0_14] : memref<24x256xf32, #tpu.memory_space<vmem>>, vector<4x256xf32>
    tpu.vector_store %arg10[%c0_13, %c0_14], %30 {strides = array<i32>} : memref<24x256xf32, #tpu.memory_space<vmem>>, vector<4x256xf32>,
    %c0_15 = arith.constant 0 : index
    %c113 = arith.constant 113 : index
    %32 = vector.load %arg9[%c0_15, %c113] : memref<4x512xf32, #tpu.memory_space<vmem>>, vector<4x256xf32>
    %33 = arith.select %24, %32, %25 : vector<4x256xi1>, vector<4x256xf32>
    %c4 = arith.constant 4 : index
    %c0_16 = arith.constant 0 : index
    %34 = vector.load %arg10[%c4, %c0_16] : memref<24x256xf32, #tpu.memory_space<vmem>>, vector<4x256xf32>
    tpu.vector_store %arg10[%c4, %c0_16], %33 {strides = array<i32>} : memref<24x256xf32, #tpu.memory_space<vmem>>, vector<4x256xf32>,
    %c0_17 = arith.constant 0 : index
    %c127 = arith.constant 127 : index
    %35 = vector.load %arg9[%c0_17, %c127] : memref<4x512xf32, #tpu.memory_space<vmem>>, vector<4x256xf32>
    %36 = arith.select %22, %35, %25 : vector<4x256xi1>, vector<4x256xf32>
    %c8 = arith.constant 8 : index
    %c0_18 = arith.constant 0 : index
    %37 = vector.load %arg10[%c8, %c0_18] : memref<24x256xf32, #tpu.memory_space<vmem>>, vector<4x256xf32>
    tpu.vector_store %arg10[%c8, %c0_18], %36 {strides = array<i32>} : memref<24x256xf32, #tpu.memory_space<vmem>>, vector<4x256xf32>,
    %c0_19 = arith.constant 0 : index
    %c129 = arith.constant 129 : index
    %38 = vector.load %arg9[%c0_19, %c129] : memref<4x512xf32, #tpu.memory_space<vmem>>, vector<4x256xf32>
    %39 = arith.select %24, %38, %25 : vector<4x256xi1>, vector<4x256xf32>
    %c12 = arith.constant 12 : index
    %c0_20 = arith.constant 0 : index
    %40 = vector.load %arg10[%c12, %c0_20] : memref<24x256xf32, #tpu.memory_space<vmem>>, vector<4x256xf32>
    tpu.vector_store %arg10[%c12, %c0_20], %39 {strides = array<i32>} : memref<24x256xf32, #tpu.memory_space<vmem>>, vector<4x256xf32>,
    %c0_21 = arith.constant 0 : index
    %c143 = arith.constant 143 : index
    %41 = vector.load %arg9[%c0_21, %c143] : memref<4x512xf32, #tpu.memory_space<vmem>>, vector<4x256xf32>
    %42 = arith.select %22, %41, %25 : vector<4x256xi1>, vector<4x256xf32>
    %c16 = arith.constant 16 : index
    %c0_22 = arith.constant 0 : index
    %43 = vector.load %arg10[%c16, %c0_22] : memref<24x256xf32, #tpu.memory_space<vmem>>, vector<4x256xf32>
    tpu.vector_store %arg10[%c16, %c0_22], %42 {strides = array<i32>} : memref<24x256xf32, #tpu.memory_space<vmem>>, vector<4x256xf32>,
    %c0_23 = arith.constant 0 : index
    %c145 = arith.constant 145 : index
    %44 = vector.load %arg9[%c0_23, %c145] : memref<4x512xf32, #tpu.memory_space<vmem>>, vector<4x256xf32>
    %45 = arith.select %24, %44, %25 : vector<4x256xi1>, vector<4x256xf32>
    %c20 = arith.constant 20 : index
    %c0_24 = arith.constant 0 : index
    %46 = vector.load %arg10[%c20, %c0_24] : memref<24x256xf32, #tpu.memory_space<vmem>>, vector<4x256xf32>
    tpu.vector_store %arg10[%c20, %c0_24], %45 {strides = array<i32>} : memref<24x256xf32, #tpu.memory_space<vmem>>, vector<4x256xf32>,
    %c0_25 = arith.constant 0 : index
    %c0_26 = arith.constant 0 : index
    %47 = vector.load %arg2[%c0_25, %c0_26] : memref<4x24xf32, #tpu.memory_space<vmem>>, vector<4x24xf32>
    %c0_27 = arith.constant 0 : index
    %c0_28 = arith.constant 0 : index
    %48 = vector.load %arg10[%c0_27, %c0_28] : memref<24x256xf32, #tpu.memory_space<vmem>>, vector<24x256xf32>
    %cst_29 = arith.constant dense<0.000000e+00> : vector<4x256xf32>
    %49 = tpu.matmul %47, %48, %cst_29 {dimension_numbers = #tpu.dot_dimension_numbers<[1], [0], [0], [1], [0, 0, 1, 1], [], []>} : vector<4x24xf32>, vector<24x256xf32>, vector<4x256xf32> -> vector<4x256xf32>
    %c0_30 = arith.constant 0 : index
    %c112 = arith.constant 112 : index
    %50 = vector.load %arg9[%c0_30, %c112] : memref<4x512xf32, #tpu.memory_space<vmem>>, vector<4x256xf32>
    %c0_31 = arith.constant 0 : index
    %c0_32 = arith.constant 0 : index
    %c0_33 = arith.constant 0 : index
    %51 = vector.load %arg3[%c0_31, %c0_32, %c0_33] : memref<3x4x4xf32, #tpu.memory_space<vmem>>, vector<1x4x4xf32>
    %52 = vector.shape_cast %51 : vector<1x4x4xf32> to vector<4x4xf32>
    %cst_34 = arith.constant dense<0.000000e+00> : vector<4x256xf32>
    %53 = tpu.matmul %52, %50, %cst_34 {dimension_numbers = #tpu.dot_dimension_numbers<[1], [0], [0], [1], [0, 0, 1, 1], [], []>} : vector<4x4xf32>, vector<4x256xf32>, vector<4x256xf32> -> vector<4x256xf32>
    %54 = arith.addf %49, %53 : vector<4x256xf32>
    %c0_35 = arith.constant 0 : index
    %c128_36 = arith.constant 128 : index
    %55 = vector.load %arg9[%c0_35, %c128_36] : memref<4x512xf32, #tpu.memory_space<vmem>>, vector<4x256xf32>
    %c1 = arith.constant 1 : index
    %c0_37 = arith.constant 0 : index
    %c0_38 = arith.constant 0 : index
    %56 = vector.load %arg3[%c1, %c0_37, %c0_38] : memref<3x4x4xf32, #tpu.memory_space<vmem>>, vector<1x4x4xf32>
    %57 = vector.shape_cast %56 : vector<1x4x4xf32> to vector<4x4xf32>
    %cst_39 = arith.constant dense<0.000000e+00> : vector<4x256xf32>
    %58 = tpu.matmul %57, %55, %cst_39 {dimension_numbers = #tpu.dot_dimension_numbers<[1], [0], [0], [1], [0, 0, 1, 1], [], []>} : vector<4x4xf32>, vector<4x256xf32>, vector<4x256xf32> -> vector<4x256xf32>
    %59 = arith.addf %54, %58 : vector<4x256xf32>
    %c0_40 = arith.constant 0 : index
    %c144 = arith.constant 144 : index
    %60 = vector.load %arg9[%c0_40, %c144] : memref<4x512xf32, #tpu.memory_space<vmem>>, vector<4x256xf32>
    %c2 = arith.constant 2 : index
    %c0_41 = arith.constant 0 : index
    %c0_42 = arith.constant 0 : index
    %61 = vector.load %arg3[%c2, %c0_41, %c0_42] : memref<3x4x4xf32, #tpu.memory_space<vmem>>, vector<1x4x4xf32>
    %62 = vector.shape_cast %61 : vector<1x4x4xf32> to vector<4x4xf32>
    %cst_43 = arith.constant dense<0.000000e+00> : vector<4x256xf32>
    %63 = tpu.matmul %62, %60, %cst_43 {dimension_numbers = #tpu.dot_dimension_numbers<[1], [0], [0], [1], [0, 0, 1, 1], [], []>} : vector<4x4xf32>, vector<4x256xf32>, vector<4x256xf32> -> vector<4x256xf32>
    %64 = arith.addf %59, %63 : vector<4x256xf32>
    %c0_44 = arith.constant 0 : index
    %c0_45 = arith.constant 0 : index
    %65 = vector.load %arg4[%c0_44, %c0_45] : memref<4x1xf32, #tpu.memory_space<vmem>>, vector<4x1xf32>
    %66 = vector.broadcast %65 : vector<4x1xf32> to vector<4x256xf32>
    %67 = arith.addf %64, %66 : vector<4x256xf32>
    %cst_46 = arith.constant 0.000000e+00 : f32
    %68 = vector.broadcast %cst_46 : f32 to vector<4x256xf32>
    %69 = arith.maximumf %67, %68 : vector<4x256xf32>
    %c0_47 = arith.constant 0 : index
    %c128_48 = arith.constant 128 : index
    %70 = vector.load %arg9[%c0_47, %c128_48] : memref<4x512xf32, #tpu.memory_space<vmem>>, vector<4x256xf32>
    tpu.vector_store %arg9[%c0_47, %c128_48], %69 {strides = array<i32>} : memref<4x512xf32, #tpu.memory_space<vmem>>, vector<4x256xf32>,
    %c0_49 = arith.constant 0 : index
    %c111_50 = arith.constant 111 : index
    %71 = vector.load %arg9[%c0_49, %c111_50] : memref<4x512xf32, #tpu.memory_space<vmem>>, vector<4x256xf32>
    %72 = arith.select %22, %71, %25 : vector<4x256xi1>, vector<4x256xf32>
    %c0_51 = arith.constant 0 : index
    %c0_52 = arith.constant 0 : index
    %73 = vector.load %arg10[%c0_51, %c0_52] : memref<24x256xf32, #tpu.memory_space<vmem>>, vector<4x256xf32>
    tpu.vector_store %arg10[%c0_51, %c0_52], %72 {strides = array<i32>} : memref<24x256xf32, #tpu.memory_space<vmem>>, vector<4x256xf32>,
    %c0_53 = arith.constant 0 : index
    %c113_54 = arith.constant 113 : index
    %74 = vector.load %arg9[%c0_53, %c113_54] : memref<4x512xf32, #tpu.memory_space<vmem>>, vector<4x256xf32>
    %75 = arith.select %24, %74, %25 : vector<4x256xi1>, vector<4x256xf32>
    %c4_55 = arith.constant 4 : index
    %c0_56 = arith.constant 0 : index
    %76 = vector.load %arg10[%c4_55, %c0_56] : memref<24x256xf32, #tpu.memory_space<vmem>>, vector<4x256xf32>
    tpu.vector_store %arg10[%c4_55, %c0_56], %75 {strides = array<i32>} : memref<24x256xf32, #tpu.memory_space<vmem>>, vector<4x256xf32>,
    %c0_57 = arith.constant 0 : index
    %c127_58 = arith.constant 127 : index
    %77 = vector.load %arg9[%c0_57, %c127_58] : memref<4x512xf32, #tpu.memory_space<vmem>>, vector<4x256xf32>
    %78 = arith.select %22, %77, %25 : vector<4x256xi1>, vector<4x256xf32>
    %c8_59 = arith.constant 8 : index
    %c0_60 = arith.constant 0 : index
    %79 = vector.load %arg10[%c8_59, %c0_60] : memref<24x256xf32, #tpu.memory_space<vmem>>, vector<4x256xf32>
    tpu.vector_store %arg10[%c8_59, %c0_60], %78 {strides = array<i32>} : memref<24x256xf32, #tpu.memory_space<vmem>>, vector<4x256xf32>,
    %c0_61 = arith.constant 0 : index
    %c129_62 = arith.constant 129 : index
    %80 = vector.load %arg9[%c0_61, %c129_62] : memref<4x512xf32, #tpu.memory_space<vmem>>, vector<4x256xf32>
    %81 = arith.select %24, %80, %25 : vector<4x256xi1>, vector<4x256xf32>
    %c12_63 = arith.constant 12 : index
    %c0_64 = arith.constant 0 : index
    %82 = vector.load %arg10[%c12_63, %c0_64] : memref<24x256xf32, #tpu.memory_space<vmem>>, vector<4x256xf32>
    tpu.vector_store %arg10[%c12_63, %c0_64], %81 {strides = array<i32>} : memref<24x256xf32, #tpu.memory_space<vmem>>, vector<4x256xf32>,
    %c0_65 = arith.constant 0 : index
    %c143_66 = arith.constant 143 : index
    %83 = vector.load %arg9[%c0_65, %c143_66] : memref<4x512xf32, #tpu.memory_space<vmem>>, vector<4x256xf32>
    %84 = arith.select %22, %83, %25 : vector<4x256xi1>, vector<4x256xf32>
    %c16_67 = arith.constant 16 : index
    %c0_68 = arith.constant 0 : index
    %85 = vector.load %arg10[%c16_67, %c0_68] : memref<24x256xf32, #tpu.memory_space<vmem>>, vector<4x256xf32>
    tpu.vector_store %arg10[%c16_67, %c0_68], %84 {strides = array<i32>} : memref<24x256xf32, #tpu.memory_space<vmem>>, vector<4x256xf32>,
    %c0_69 = arith.constant 0 : index
    %c145_70 = arith.constant 145 : index
    %86 = vector.load %arg9[%c0_69, %c145_70] : memref<4x512xf32, #tpu.memory_space<vmem>>, vector<4x256xf32>
    %87 = arith.select %24, %86, %25 : vector<4x256xi1>, vector<4x256xf32>
    %c20_71 = arith.constant 20 : index
    %c0_72 = arith.constant 0 : index
    %88 = vector.load %arg10[%c20_71, %c0_72] : memref<24x256xf32, #tpu.memory_space<vmem>>, vector<4x256xf32>
    tpu.vector_store %arg10[%c20_71, %c0_72], %87 {strides = array<i32>} : memref<24x256xf32, #tpu.memory_space<vmem>>, vector<4x256xf32>,
    %c0_73 = arith.constant 0 : index
    %c0_74 = arith.constant 0 : index
    %89 = vector.load %arg5[%c0_73, %c0_74] : memref<4x24xf32, #tpu.memory_space<vmem>>, vector<4x24xf32>
    %c0_75 = arith.constant 0 : index
    %c0_76 = arith.constant 0 : index
    %90 = vector.load %arg10[%c0_75, %c0_76] : memref<24x256xf32, #tpu.memory_space<vmem>>, vector<24x256xf32>
    %cst_77 = arith.constant dense<0.000000e+00> : vector<4x256xf32>
    %91 = tpu.matmul %89, %90, %cst_77 {dimension_numbers = #tpu.dot_dimension_numbers<[1], [0], [0], [1], [0, 0, 1, 1], [], []>} : vector<4x24xf32>, vector<24x256xf32>, vector<4x256xf32> -> vector<4x256xf32>
    %c0_78 = arith.constant 0 : index
    %c112_79 = arith.constant 112 : index
    %92 = vector.load %arg9[%c0_78, %c112_79] : memref<4x512xf32, #tpu.memory_space<vmem>>, vector<4x256xf32>
    %c0_80 = arith.constant 0 : index
    %c0_81 = arith.constant 0 : index
    %c0_82 = arith.constant 0 : index
    %93 = vector.load %arg6[%c0_80, %c0_81, %c0_82] : memref<3x4x4xf32, #tpu.memory_space<vmem>>, vector<1x4x4xf32>
    %94 = vector.shape_cast %93 : vector<1x4x4xf32> to vector<4x4xf32>
    %cst_83 = arith.constant dense<0.000000e+00> : vector<4x256xf32>
    %95 = tpu.matmul %94, %92, %cst_83 {dimension_numbers = #tpu.dot_dimension_numbers<[1], [0], [0], [1], [0, 0, 1, 1], [], []>} : vector<4x4xf32>, vector<4x256xf32>, vector<4x256xf32> -> vector<4x256xf32>
    %96 = arith.addf %91, %95 : vector<4x256xf32>
    %c0_84 = arith.constant 0 : index
    %c128_85 = arith.constant 128 : index
    %97 = vector.load %arg9[%c0_84, %c128_85] : memref<4x512xf32, #tpu.memory_space<vmem>>, vector<4x256xf32>
    %c1_86 = arith.constant 1 : index
    %c0_87 = arith.constant 0 : index
    %c0_88 = arith.constant 0 : index
    %98 = vector.load %arg6[%c1_86, %c0_87, %c0_88] : memref<3x4x4xf32, #tpu.memory_space<vmem>>, vector<1x4x4xf32>
    %99 = vector.shape_cast %98 : vector<1x4x4xf32> to vector<4x4xf32>
    %cst_89 = arith.constant dense<0.000000e+00> : vector<4x256xf32>
    %100 = tpu.matmul %99, %97, %cst_89 {dimension_numbers = #tpu.dot_dimension_numbers<[1], [0], [0], [1], [0, 0, 1, 1], [], []>} : vector<4x4xf32>, vector<4x256xf32>, vector<4x256xf32> -> vector<4x256xf32>
    %101 = arith.addf %96, %100 : vector<4x256xf32>
    %c0_90 = arith.constant 0 : index
    %c144_91 = arith.constant 144 : index
    %102 = vector.load %arg9[%c0_90, %c144_91] : memref<4x512xf32, #tpu.memory_space<vmem>>, vector<4x256xf32>
    %c2_92 = arith.constant 2 : index
    %c0_93 = arith.constant 0 : index
    %c0_94 = arith.constant 0 : index
    %103 = vector.load %arg6[%c2_92, %c0_93, %c0_94] : memref<3x4x4xf32, #tpu.memory_space<vmem>>, vector<1x4x4xf32>
    %104 = vector.shape_cast %103 : vector<1x4x4xf32> to vector<4x4xf32>
    %cst_95 = arith.constant dense<0.000000e+00> : vector<4x256xf32>
    %105 = tpu.matmul %104, %102, %cst_95 {dimension_numbers = #tpu.dot_dimension_numbers<[1], [0], [0], [1], [0, 0, 1, 1], [], []>} : vector<4x4xf32>, vector<4x256xf32>, vector<4x256xf32> -> vector<4x256xf32>
    %106 = arith.addf %101, %105 : vector<4x256xf32>
    %c0_96 = arith.constant 0 : index
    %c0_97 = arith.constant 0 : index
    %107 = vector.load %arg7[%c0_96, %c0_97] : memref<4x1xf32, #tpu.memory_space<vmem>>, vector<4x1xf32>
    %108 = vector.broadcast %107 : vector<4x1xf32> to vector<4x256xf32>
    %109 = arith.addf %106, %108 : vector<4x256xf32>
    %c0_98 = arith.constant 0 : index
    %c0_99 = arith.constant 0 : index
    %c0_100 = arith.constant 0 : index
    %110 = vector.load %arg1[%c0_98, %c0_99, %c0_100] : memref<1x4x256xf32, #tpu.memory_space<vmem>>, vector<1x4x256xf32>
    %111 = vector.shape_cast %110 : vector<1x4x256xf32> to vector<4x256xf32>
    %112 = arith.addf %109, %111 : vector<4x256xf32>
    %cst_101 = arith.constant 0.000000e+00 : f32
    %113 = vector.broadcast %cst_101 : f32 to vector<4x256xf32>
    %114 = arith.maximumf %112, %113 : vector<4x256xf32>
    %c0_102 = arith.constant 0 : index
    %c0_103 = arith.constant 0 : index
    %c0_104 = arith.constant 0 : index
    %115 = vector.load %arg8[%c0_102, %c0_103, %c0_104] : memref<1x4x256xf32, #tpu.memory_space<vmem>>, vector<1x4x256xf32>
    %116 = vector.shape_cast %115 : vector<1x4x256xf32> to vector<4x256xf32>
    %117 = vector.shape_cast %114 : vector<4x256xf32> to vector<1x4x256xf32>
    tpu.vector_store %arg8[%c0_102, %c0_103, %c0_104], %117 {strides = array<i32>} : memref<1x4x256xf32, #tpu.memory_space<vmem>>, vector<1x4x256xf32>,
    return
  }
  func.func @transform_0(%arg0: i32) -> (i32, i32, i32) {
    %c0_i32 = arith.constant 0 : i32
    %c0_i32_0 = arith.constant 0 : i32
    %c0_i32_1 = arith.constant 0 : i32
    return %arg0, %c0_i32, %c0_i32_0 : i32, i32, i32
  }
  func.func @transform_1(%arg0: i32) -> (i32, i32) {
    %c0_i32 = arith.constant 0 : i32
    %c0_i32_0 = arith.constant 0 : i32
    %c0_i32_1 = arith.constant 0 : i32
    return %c0_i32, %c0_i32_0 : i32, i32
  }
  func.func @transform_2(%arg0: i32) -> (i32, i32, i32) {
    %c0_i32 = arith.constant 0 : i32
    %c0_i32_0 = arith.constant 0 : i32
    %c0_i32_1 = arith.constant 0 : i32
    %c0_i32_2 = arith.constant 0 : i32
    return %c0_i32, %c0_i32_0, %c0_i32_1 : i32, i32, i32
  }
  func.func @transform_3(%arg0: i32) -> (i32, i32) {
    %c0_i32 = arith.constant 0 : i32
    %c0_i32_0 = arith.constant 0 : i32
    %c0_i32_1 = arith.constant 0 : i32
    return %c0_i32, %c0_i32_0 : i32, i32
  }
  func.func @transform_4(%arg0: i32) -> (i32, i32) {
    %c0_i32 = arith.constant 0 : i32
    %c0_i32_0 = arith.constant 0 : i32
    %c0_i32_1 = arith.constant 0 : i32
    return %c0_i32, %c0_i32_0 : i32, i32
  }
  func.func @transform_5(%arg0: i32) -> (i32, i32, i32) {
    %c0_i32 = arith.constant 0 : i32
    %c0_i32_0 = arith.constant 0 : i32
    %c0_i32_1 = arith.constant 0 : i32
    %c0_i32_2 = arith.constant 0 : i32
    return %c0_i32, %c0_i32_0, %c0_i32_1 : i32, i32, i32
  }
  func.func @transform_6(%arg0: i32) -> (i32, i32) {
    %c0_i32 = arith.constant 0 : i32
    %c0_i32_0 = arith.constant 0 : i32
    %c0_i32_1 = arith.constant 0 : i32
    return %c0_i32, %c0_i32_0 : i32, i32
  }
  func.func @transform_7(%arg0: i32) -> (i32, i32, i32) {
    %c0_i32 = arith.constant 0 : i32
    %c0_i32_0 = arith.constant 0 : i32
    %c0_i32_1 = arith.constant 0 : i32
    return %arg0, %c0_i32, %c0_i32_0 : i32, i32, i32
  }
}

</mosaic_0001>

<llo_original>
// kernel: resnet_basicblock.1
$region0: #{resnet_basicblock.1}
  #allocation0 [shape = 'u32[]', space=smem, size = 0x4, offset = 0x4, fixed_abs, tag = 'smem constant byte address 0x4 - core index']
  #allocation1 [shape = 'u32[72,128]{1,0:T(1,128)}', space=vmem, size = 0x9000, scoped, tag = 'internal scratch']
  #allocation2 [shape = 'f32[4,512]{1,0:T(4,128)}', space=vmem, size = 0x2000, scoped, tag = 'scratch operand']
  #allocation3 [shape = 'f32[24,256]{1,0:T(8,128)}', space=vmem, size = 0x6000, scoped, tag = 'scratch operand']
  %s0 = inlined_call_operand.vmem [shape: f32[2,4,256], index: 0, kind: input, shape index: {}]
  %s1 = inlined_call_operand.vmem [shape: f32[4,24], index: 1, kind: input, shape index: {}]
  %s2 = inlined_call_operand.vmem [shape: f32[3,4,4], index: 2, kind: input, shape index: {}]
  %s3 = inlined_call_operand.vmem [shape: f32[4,1], index: 3, kind: input, shape index: {}]
  %s4 = inlined_call_operand.vmem [shape: f32[4,24], index: 4, kind: input, shape index: {}]
  %s5 = inlined_call_operand.vmem [shape: f32[3,4,4], index: 5, kind: input, shape index: {}]
  %s6 = inlined_call_operand.vmem [shape: f32[4,1], index: 6, kind: input, shape index: {}]
  %s7 = inlined_call_operand.vmem [shape: f32[2,4,256], index: 7, kind: output, shape index: {}]
  %s8 = sld [smem:[#allocation0]]
  $region61: #{resnet_basicblock.1} parent=0
    _
  %s10 = ssub.s32 1, %s8
  %s11 = scalar_select 0, %s10, %s8
  loop: start=0, step=1, limit=4
  $region2: #{resnet_basicblock.1} parent=0 // loop_pre_header
    _
  $region3: #{resnet_basicblock.1} parent=0 // loop_header
    %s13 = sphi 0, %s17
    %p14 = scmp.ge.s32.totalorder %s13, 4
    %s23 = sphi 0, %s25
    %s26 = sphi 0, %s23
    %s27 = sphi 0, %s26
    %s43 = sphi 0, %s27
    %s47 = sphi 0, %s47
    %s49 = sphi 0, %s47
    %s50 = sphi 0, %s49
    %s64 = sphi 0, %s50
    %s68 = sphi 0, %s68
    %s70 = sphi 0, %s68
    %s71 = sphi 0, %s70
    %s85 = sphi 0, %s71
    %s89 = sphi 0, %s89
    %s91 = sphi 0, %s89
    %s92 = sphi 0, %s91
    %s106 = sphi 0, %s92
    %s110 = sphi 0, %s110
    %s112 = sphi 0, %s110
    %s113 = sphi 0, %s112
    %s127 = sphi 0, %s113
    %s131 = sphi 0, %s131
    %s133 = sphi 0, %s131
    %s134 = sphi 0, %s133
    %s148 = sphi 0, %s134
    %s152 = sphi 0, %s152
    %s154 = sphi 0, %s152
    %s155 = sphi 0, %s154
    %s169 = sphi 0, %s155
    %s175 = sphi 0, %s177
    %s178 = sphi 0, %s175
    %s179 = sphi 0, %s178
    %s195 = sphi 0, %s179
  $region4: #{resnet_basicblock.1} parent=0 // loop_header_branch
    %16 = sbr.rel (%p14) target = $region8
  $region5: #{resnet_basicblock.1} parent=0 // loop_body
    %s18 = ssub.s32 %s13, 1
    %s19 = ssub.s32 %s13, 2
    %s20 = sadd.s32 %s13, 1
    %s21 = ssub.s32 %s13, %s20
    %p22 = scmp.eq.s32.totalorder %s21, 0
    %s24 = sadd.s32 %s23, 1
    %s25 = scalar_select %p22, %s23, %s24
    %p28 = pneg %p22
    %p29 = scmp.eq.s32.totalorder %s13, 1
    %p30 = por %p28, %p29
    %p31 = scmp.ne.s32.totalorder %s23, %s26
    %p32 = scmp.eq.s32.totalorder %s13, 0
    %p33 = por %p31, %p32
    %p34 = scmp.ne.s32.totalorder %s23, %s26
    %p35 = scmp.eq.s32.totalorder %s18, 1
    %p36 = por %p34, %p35
    %p37 = scmp.ne.s32.totalorder %s26, %s27
    %p38 = scmp.eq.s32.totalorder %s18, 0
    %p39 = por %p37, %p38
    %p40 = scmp.ne.s32.totalorder %s26, %s27
    %p41 = scmp.eq.s32.totalorder %s19, 1
    %p42 = por %p40, %p41
    %p44 = scmp.ne.s32.totalorder %s27, %s43
    %p45 = scmp.eq.s32.totalorder %s19, 0
    %p46 = por %p44, %p45
    %s48 = sadd.s32 %s47, 1
    %p51 = scmp.eq.s32.totalorder %s13, 1
    %p52 = scmp.ne.s32.totalorder %s47, %s49
    %p53 = scmp.eq.s32.totalorder %s13, 0
    %p54 = por %p52, %p53
    %p55 = scmp.ne.s32.totalorder %s47, %s49
    %p56 = scmp.eq.s32.totalorder %s18, 1
    %p57 = por %p55, %p56
    %p58 = scmp.ne.s32.totalorder %s49, %s50
    %p59 = scmp.eq.s32.totalorder %s18, 0
    %p60 = por %p58, %p59
    %p61 = scmp.ne.s32.totalorder %s49, %s50
    %p62 = scmp.eq.s32.totalorder %s19, 1
    %p63 = por %p61, %p62
    %p65 = scmp.ne.s32.totalorder %s50, %s64
    %p66 = scmp.eq.s32.totalorder %s19, 0
    %p67 = por %p65, %p66
    %s69 = sadd.s32 %s68, 1
    %p72 = scmp.eq.s32.totalorder %s13, 1
    %p73 = scmp.ne.s32.totalorder %s68, %s70
    %p74 = scmp.eq.s32.totalorder %s13, 0
    %p75 = por %p73, %p74
    %p76 = scmp.ne.s32.totalorder %s68, %s70
    %p77 = scmp.eq.s32.totalorder %s18, 1
    %p78 = por %p76, %p77
    %p79 = scmp.ne.s32.totalorder %s70, %s71
    %p80 = scmp.eq.s32.totalorder %s18, 0
    %p81 = por %p79, %p80
    %p82 = scmp.ne.s32.totalorder %s70, %s71
    %p83 = scmp.eq.s32.totalorder %s19, 1
    %p84 = por %p82, %p83
    %p86 = scmp.ne.s32.totalorder %s71, %s85
    %p87 = scmp.eq.s32.totalorder %s19, 0
    %p88 = por %p86, %p87
    %s90 = sadd.s32 %s89, 1
    %p93 = scmp.eq.s32.totalorder %s13, 1
    %p94 = scmp.ne.s32.totalorder %s89, %s91
    %p95 = scmp.eq.s32.totalorder %s13, 0
    %p96 = por %p94, %p95
    %p97 = scmp.ne.s32.totalorder %s89, %s91
    %p98 = scmp.eq.s32.totalorder %s18, 1
    %p99 = por %p97, %p98
    %p100 = scmp.ne.s32.totalorder %s91, %s92
    %p101 = scmp.eq.s32.totalorder %s18, 0
    %p102 = por %p100, %p101
    %p103 = scmp.ne.s32.totalorder %s91, %s92
    %p104 = scmp.eq.s32.totalorder %s19, 1
    %p105 = por %p103, %p104
    %p107 = scmp.ne.s32.totalorder %s92, %s106
    %p108 = scmp.eq.s32.totalorder %s19, 0
    %p109 = por %p107, %p108
    %s111 = sadd.s32 %s110, 1
    %p114 = scmp.eq.s32.totalorder %s13, 1
    %p115 = scmp.ne.s32.totalorder %s110, %s112
    %p116 = scmp.eq.s32.totalorder %s13, 0
    %p117 = por %p115, %p116
    %p118 = scmp.ne.s32.totalorder %s110, %s112
    %p119 = scmp.eq.s32.totalorder %s18, 1
    %p120 = por %p118, %p119
    %p121 = scmp.ne.s32.totalorder %s112, %s113
    %p122 = scmp.eq.s32.totalorder %s18, 0
    %p123 = por %p121, %p122
    %p124 = scmp.ne.s32.totalorder %s112, %s113
    %p125 = scmp.eq.s32.totalorder %s19, 1
    %p126 = por %p124, %p125
    %p128 = scmp.ne.s32.totalorder %s113, %s127
    %p129 = scmp.eq.s32.totalorder %s19, 0
    %p130 = por %p128, %p129
    %s132 = sadd.s32 %s131, 1
    %p135 = scmp.eq.s32.totalorder %s13, 1
    %p136 = scmp.ne.s32.totalorder %s131, %s133
    %p137 = scmp.eq.s32.totalorder %s13, 0
    %p138 = por %p136, %p137
    %p139 = scmp.ne.s32.totalorder %s131, %s133
    %p140 = scmp.eq.s32.totalorder %s18, 1
    %p141 = por %p139, %p140
    %p142 = scmp.ne.s32.totalorder %s133, %s134
    %p143 = scmp.eq.s32.totalorder %s18, 0
    %p144 = por %p142, %p143
    %p145 = scmp.ne.s32.totalorder %s133, %s134
    %p146 = scmp.eq.s32.totalorder %s19, 1
    %p147 = por %p145, %p146
    %p149 = scmp.ne.s32.totalorder %s134, %s148
    %p150 = scmp.eq.s32.totalorder %s19, 0
    %p151 = por %p149, %p150
    %s153 = sadd.s32 %s152, 1
    %p156 = scmp.eq.s32.totalorder %s13, 1
    %p157 = scmp.ne.s32.totalorder %s152, %s154
    %p158 = scmp.eq.s32.totalorder %s13, 0
    %p159 = por %p157, %p158
    %p160 = scmp.ne.s32.totalorder %s152, %s154
    %p161 = scmp.eq.s32.totalorder %s18, 1
    %p162 = por %p160, %p161
    %p163 = scmp.ne.s32.totalorder %s154, %s155
    %p164 = scmp.eq.s32.totalorder %s18, 0
    %p165 = por %p163, %p164
    %p166 = scmp.ne.s32.totalorder %s154, %s155
    %p167 = scmp.eq.s32.totalorder %s19, 1
    %p168 = por %p166, %p167
    %p170 = scmp.ne.s32.totalorder %s155, %s169
    %p171 = scmp.eq.s32.totalorder %s19, 0
    %p172 = por %p170, %p171
    %s173 = ssub.s32 %s13, %s20
    %p174 = scmp.eq.s32.totalorder %s173, 0
    %s176 = sadd.s32 %s175, 1
    %s177 = scalar_select %p174, %s175, %s176
    %p180 = pneg %p174
    %p181 = scmp.eq.s32.totalorder %s13, 1
    %p182 = por %p180, %p181
    %p183 = scmp.ne.s32.totalorder %s175, %s178
    %p184 = scmp.eq.s32.totalorder %s13, 0
    %p185 = por %p183, %p184
    %p186 = scmp.ne.s32.totalorder %s175, %s178
    %p187 = scmp.eq.s32.totalorder %s18, 1
    %p188 = por %p186, %p187
    %p189 = scmp.ne.s32.totalorder %s178, %s179
    %p190 = scmp.eq.s32.totalorder %s18, 0
    %p191 = por %p189, %p190
    %p192 = scmp.ne.s32.totalorder %s178, %s179
    %p193 = scmp.eq.s32.totalorder %s19, 1
    %p194 = por %p192, %p193
    %p196 = scmp.ne.s32.totalorder %s179, %s195
    %p197 = scmp.eq.s32.totalorder %s19, 0
    %p198 = por %p196, %p197
    %p199 = scmp.le.s32.totalorder 1, %s13
    %p200 = scmp.lt.s32.totalorder %s13, 3
    %p201 = pnand %p199, %p200
    %p202 = pneg %p201
    // Predicated region
    $region9: #{resnet_basicblock.1} parent=5 // pred_check
      _
    $region10: #{resnet_basicblock.1} parent=5 // pred_check_branch
      %204 = sbr.rel (%p201) target = $region12
    $region11: #{resnet_basicblock.1} parent=5 // pred_region
      %s205 = ssub.s32 %s13, 1
      // Predicated region
      $region13: #{resnet_basicblock.1} parent=11 // pred_check
        %p206 = pneg %p60
      $region14: #{resnet_basicblock.1} parent=11 // pred_check_branch
        %208 = sbr.rel (%p206) target = $region16
      $region15: #{resnet_basicblock.1} parent=11 // pred_region
        _
      $region16: #{resnet_basicblock.1} parent=11 // pred_fallthru
        _
      // Predicated region
      $region17: #{resnet_basicblock.1} parent=11 // pred_check
        %p209 = pneg %p81
      $region18: #{resnet_basicblock.1} parent=11 // pred_check_branch
        %211 = sbr.rel (%p209) target = $region20
      $region19: #{resnet_basicblock.1} parent=11 // pred_region
        _
      $region20: #{resnet_basicblock.1} parent=11 // pred_fallthru
        _
      // Predicated region
      $region21: #{resnet_basicblock.1} parent=11 // pred_check
        %p212 = pneg %p102
      $region22: #{resnet_basicblock.1} parent=11 // pred_check_branch
        %214 = sbr.rel (%p212) target = $region24
      $region23: #{resnet_basicblock.1} parent=11 // pred_region
        _
      $region24: #{resnet_basicblock.1} parent=11 // pred_fallthru
        _
      // Predicated region
      $region25: #{resnet_basicblock.1} parent=11 // pred_check
        %p215 = pneg %p123
      $region26: #{resnet_basicblock.1} parent=11 // pred_check_branch
        %217 = sbr.rel (%p215) target = $region28
      $region27: #{resnet_basicblock.1} parent=11 // pred_region
        _
      $region28: #{resnet_basicblock.1} parent=11 // pred_fallthru
        _
      // Predicated region
      $region29: #{resnet_basicblock.1} parent=11 // pred_check
        %p218 = pneg %p144
      $region30: #{resnet_basicblock.1} parent=11 // pred_check_branch
        %220 = sbr.rel (%p218) target = $region32
      $region31: #{resnet_basicblock.1} parent=11 // pred_region
        _
      $region32: #{resnet_basicblock.1} parent=11 // pred_fallthru
        _
      // Predicated region
      $region33: #{resnet_basicblock.1} parent=11 // pred_check
        %p221 = pneg %p165
      $region34: #{resnet_basicblock.1} parent=11 // pred_check_branch
        %223 = sbr.rel (%p221) target = $region36
      $region35: #{resnet_basicblock.1} parent=11 // pred_region
        _
      $region36: #{resnet_basicblock.1} parent=11 // pred_fallthru
        _
    $region12: #{resnet_basicblock.1} parent=5 // pred_fallthru
      _
    %p224 = scmp.lt.s32.totalorder %s13, 2
    // Predicated region
    $region37: #{resnet_basicblock.1} parent=5 // pred_check
      %p225 = pneg %p224
    $region38: #{resnet_basicblock.1} parent=5 // pred_check_branch
      %227 = sbr.rel (%p225) target = $region40
    $region39: #{resnet_basicblock.1} parent=5 // pred_region
      // Predicated region
      $region41: #{resnet_basicblock.1} parent=39 // pred_check
        %p228 = pneg %p33
      $region42: #{resnet_basicblock.1} parent=39 // pred_check_branch
        %230 = sbr.rel (%p228) target = $region44
      $region43: #{resnet_basicblock.1} parent=39 // pred_region
        %p231 = scmp.lt.s32.totalorder %s13, 1
        %s232 = scalar_select %p231, %s13, 1
        %s233 = smul.addr %s232, 2
        %s234 = smul.addr %s233, 4
        %s235 = scalar_lea.vmem %s0, %s234
      $region44: #{resnet_basicblock.1} parent=39 // pred_fallthru
        _
    $region40: #{resnet_basicblock.1} parent=5 // pred_fallthru
      _
    %p236 = scmp.le.s32.totalorder 1, %s13
    %p237 = scmp.lt.s32.totalorder %s13, 3
    %p238 = pnand %p236, %p237
    %p239 = pneg %p238
    // Predicated region
    $region45: #{resnet_basicblock.1} parent=5 // pred_check
      _
    $region46: #{resnet_basicblock.1} parent=5 // pred_check_branch
      %241 = sbr.rel (%p238) target = $region48
    $region47: #{resnet_basicblock.1} parent=5 // pred_region
      %s242 = ssub.s32 %s13, 1
      %p243 = scmp.lt.s32.totalorder %s18, 1
      %s244 = scalar_select %p243, %s18, 1
      %s245 = smul.addr %s244, 2
      %s246 = smul.addr %s245, 4
      %s247 = scalar_lea.vmem %s0, %s246
      %p248 = pneg %p39
      %p249 = pneg %p36
      %p250 = pneg %p60
      %p251 = pneg %p57
      %p252 = pneg %p81
      %p253 = pneg %p78
      %p254 = pneg %p102
      %p255 = pneg %p99
      %p256 = pneg %p123
      %p257 = pneg %p120
      %p258 = pneg %p144
      %p259 = pneg %p141
      %p260 = pneg %p165
      %p261 = pneg %p162
      %p262 = pneg %p191
      %p263 = pneg %p188
      %p264 = scmp.lt.s32.totalorder %s18, 1
      %s265 = scalar_select %p264, %s18, 1
      %s266 = smul.addr %s265, 2
      %s267 = smul.addr %s266, 4
      %s268 = scalar_lea.vmem %s7, %s267
      %p269 = scmp.lt.s32.totalorder %s18, 1
      %s270 = scalar_select %p269, %s18, 1
      %s271 = smul.addr %s270, 2
      %s272 = smul.addr %s271, 4
      %s273 = scalar_lea.vmem %s0, %s272
      %p274 = scmp.lt.s32.totalorder %s18, 1
      %s275 = scalar_select %p274, %s18, 1
      %s276 = smul.addr %s275, 2
      %s277 = smul.addr %s276, 4
      %s278 = scalar_lea.vmem %s7, %s277
      %279 = vst [vmem:[#allocation2] sm:$0xf] 0.0
      %280 = vst [vmem:[#allocation2 + $0xc] sm:$0xf] 0.0
      %v281 = vlaneseq
      %v282 = vand.u32 %v281, 127
      %v283 = vadd.s32 %v282, 128
      %vm284 = vcmp.lt.s32.totalorder %v282, 0
      %v285 = vsub.s32 0, %v282
      %v286 = vsel %vm284, %v285, %v282
      %v287 = vshrl.u32 %v286, 4
      %v288 = vand.u32 %v286, 15
      %v289 = vsub.s32 0, %v288
      %v290 = vsel %vm284, %v289, %v288
      %vm291 = vcmp.lt.s32.totalorder %v283, 0
      %v292 = vsub.s32 0, %v283
      %v293 = vsel %vm291, %v292, %v283
      %v294 = vshrl.u32 %v293, 4
      %v295 = vand.u32 %v293, 15
      %v296 = vsub.s32 0, %v295
      %v297 = vsel %vm291, %v296, %v295
      %vm298 = vcmp.ne.s32.totalorder %v290, 0
      %vm299 = vcmp.ne.s32.totalorder %v297, 0
      %vm300 = vcmp.lt.s32.totalorder %v290, 0
      %vm301 = vcmp.lt.s32.totalorder %v297, 0
      %vm302 = vmand %vm300, %vm298
      %vm303 = vmand %vm301, %vm299
      %v304 = vadd.s32 %v290, 16
      %v305 = vadd.s32 %v297, 16
      %v306 = vsel %vm302, %v304, %v290
      %v307 = vsel %vm303, %v305, %v297
      %vm308 = vcmp.gt.s32.totalorder %v306, 0
      %vm309 = vcmp.gt.s32.totalorder %v307, 0
      %vm310 = vcmp.lt.s32.totalorder %v306, 15
      %vm311 = vcmp.lt.s32.totalorder %v307, 15
      %v312 = vld [vmem:[%s273] sm:$0xff]
      %313 = vst [vmem:[#allocation2 + $0x4] sm:$0xff] %v312
      %v314 = vld [vmem:[#allocation2] sm:$0xff]
      %v315 = vld [vmem:[#allocation2 + $0x8] sm:$0xf]
      %318 = vst [vmem:[#allocation1] ss:$2 sm:$0xff] %v314
      %s319 = scalar_lea.vmem [#allocation1], 16
      %320 = vst [vmem:[%s319] ss:$2 sm:$0xff] %v315
      %v321 = vld.sshfl [vmem:[#allocation1] sm:$0xff pattern:$0x75316420]
      %v322 = vld.sshfl [vmem:[#allocation1 + $0x8] sm:$0xff pattern:$0x75316420]
      %v323 = vld.sshfl [vmem:[#allocation1 + $0x10] sm:$0xff pattern:$0x75316420]
      %324 = vrot.lane.b32.xlu0 %v321, 17
      %v325 = vpop.permute.xlu0 %324
      %326 = vrot.lane.b32.xlu0 %v322, 17
      %v327 = vpop.permute.xlu0 %326
      %328 = vrot.lane.b32.xlu0 %v323, 17
      %v329 = vpop.permute.xlu0 %328
      %vm330 = vcmask 138240
      %v331 = vsel %vm330, %v325, %v327
      %v332 = vsel %vm330, %v327, %v329
      %v335 = vsel %vm308, %v331, 0.0
      %v336 = vsel %vm309, %v332, 0.0
      %337 = vst [vmem:[#allocation3] sm:$0xf] %v335
      %338 = vst [vmem:[#allocation3 + $0x8] sm:$0xf] %v336
      %v339 = vld [vmem:[#allocation2] sm:$0xff]
      %v340 = vld [vmem:[#allocation2 + $0x8] sm:$0xf]
      %343 = vst [vmem:[#allocation1] ss:$2 sm:$0xff] %v339
      %s344 = scalar_lea.vmem [#allocation1], 16
      %345 = vst [vmem:[%s344] ss:$2 sm:$0xff] %v340
      %v346 = vld.sshfl [vmem:[#allocation1] sm:$0xff pattern:$0x75316420]
      %v347 = vld.sshfl [vmem:[#allocation1 + $0x8] sm:$0xff pattern:$0x75316420]
      %v348 = vld.sshfl [vmem:[#allocation1 + $0x10] sm:$0xff pattern:$0x75316420]
      %349 = vrot.lane.b32.xlu0 %v346, 15
      %v350 = vpop.permute.xlu0 %349
      %351 = vrot.lane.b32.xlu0 %v347, 15
      %v352 = vpop.permute.xlu0 %351
      %353 = vrot.lane.b32.xlu0 %v348, 15
      %v354 = vpop.permute.xlu0 %353
      %vm355 = vcmask 121856
      %v356 = vsel %vm355, %v350, %v352
      %v357 = vsel %vm355, %v352, %v354
      %v360 = vsel %vm310, %v356, 0.0
      %v361 = vsel %vm311, %v357, 0.0
      %v364 = vrot.slane %v360, 4
      %v365 = vrot.slane %v361, 4
      %368 = vst [vmem:[#allocation3] sm:$0xf0] %v364
      %369 = vst [vmem:[#allocation3 + $0x8] sm:$0xf0] %v365
      %v370 = vld [vmem:[#allocation2] sm:$0xff]
      %v371 = vld [vmem:[#allocation2 + $0x8] sm:$0xf]
      %374 = vst [vmem:[#allocation1] ss:$2 sm:$0xff] %v370
      %s375 = scalar_lea.vmem [#allocation1], 16
      %376 = vst [vmem:[%s375] ss:$2 sm:$0xff] %v371
      %v377 = vld.sshfl [vmem:[#allocation1] sm:$0xff pattern:$0x75316420]
      %v378 = vld.sshfl [vmem:[#allocation1 + $0x8] sm:$0xff pattern:$0x75316420]
      %v379 = vld.sshfl [vmem:[#allocation1 + $0x10] sm:$0xff pattern:$0x75316420]
      %380 = vrot.lane.b32.xlu0 %v377, 1
      %v381 = vpop.permute.xlu0 %380
      %382 = vrot.lane.b32.xlu0 %v378, 1
      %v383 = vpop.permute.xlu0 %382
      %384 = vrot.lane.b32.xlu0 %v379, 1
      %v385 = vpop.permute.xlu0 %384
      %vm386 = vcmask 7168
      %v387 = vsel %vm386, %v381, %v383
      %v388 = vsel %vm386, %v383, %v385
      %v391 = vsel %vm308, %v387, 0.0
      %v392 = vsel %vm309, %v388, 0.0
      %393 = vst [vmem:[#allocation3 + $0x10] sm:$0xf] %v391
      %394 = vst [vmem:[#allocation3 + $0x18] sm:$0xf] %v392
      %v395 = vld [vmem:[#allocation2 + $0x4] sm:$0xff]
      %v396 = vld [vmem:[#allocation2 + $0xc] sm:$0xf]
      %399 = vst [vmem:[#allocation1] ss:$2 sm:$0xff] %v395
      %s400 = scalar_lea.vmem [#allocation1], 16
      %401 = vst [vmem:[%s400] ss:$2 sm:$0xff] %v396
      %v402 = vld.sshfl [vmem:[#allocation1] sm:$0xff pattern:$0x75316420]
      %v403 = vld.sshfl [vmem:[#allocation1 + $0x8] sm:$0xff pattern:$0x75316420]
      %v404 = vld.sshfl [vmem:[#allocation1 + $0x10] sm:$0xff pattern:$0x75316420]
      %405 = vrot.lane.b32.xlu0 %v402, 127
      %v406 = vpop.permute.xlu0 %405
      %407 = vrot.lane.b32.xlu0 %v403, 127
      %v408 = vpop.permute.xlu0 %407
      %409 = vrot.lane.b32.xlu0 %v404, 127
      %v410 = vpop.permute.xlu0 %409
      %vm411 = vcmask 1039360
      %v412 = vsel %vm411, %v406, %v408
      %v413 = vsel %vm411, %v408, %v410
      %v416 = vsel %vm310, %v412, 0.0
      %v417 = vsel %vm311, %v413, 0.0
      %v420 = vrot.slane %v416, 4
      %v421 = vrot.slane %v417, 4
      %424 = vst [vmem:[#allocation3 + $0x10] sm:$0xf0] %v420
      %425 = vst [vmem:[#allocation3 + $0x18] sm:$0xf0] %v421
      %v426 = vld [vmem:[#allocation2 + $0x4] sm:$0xff]
      %v427 = vld [vmem:[#allocation2 + $0xc] sm:$0xf]
      %430 = vst [vmem:[#allocation1] ss:$2 sm:$0xff] %v426
      %s431 = scalar_lea.vmem [#allocation1], 16
      %432 = vst [vmem:[%s431] ss:$2 sm:$0xff] %v427
      %v433 = vld.sshfl [vmem:[#allocation1] sm:$0xff pattern:$0x75316420]
      %v434 = vld.sshfl [vmem:[#allocation1 + $0x8] sm:$0xff pattern:$0x75316420]
      %v435 = vld.sshfl [vmem:[#allocation1 + $0x10] sm:$0xff pattern:$0x75316420]
      %436 = vrot.lane.b32.xlu0 %v433, 113
      %v437 = vpop.permute.xlu0 %436
      %438 = vrot.lane.b32.xlu0 %v434, 113
      %v439 = vpop.permute.xlu0 %438
      %440 = vrot.lane.b32.xlu0 %v435, 113
      %v441 = vpop.permute.xlu0 %440
      %vm442 = vcmask 924672
      %v443 = vsel %vm442, %v437, %v439
      %v444 = vsel %vm442, %v439, %v441
      %v447 = vsel %vm308, %v443, 0.0
      %v448 = vsel %vm309, %v444, 0.0
      %449 = vst [vmem:[#allocation3 + $0x20] sm:$0xf] %v447
      %450 = vst [vmem:[#allocation3 + $0x28] sm:$0xf] %v448
      %v451 = vld [vmem:[#allocation2 + $0x4] sm:$0xff]
      %v452 = vld [vmem:[#allocation2 + $0xc] sm:$0xf]
      %455 = vst [vmem:[#allocation1] ss:$2 sm:$0xff] %v451
      %s456 = scalar_lea.vmem [#allocation1], 16
      %457 = vst [vmem:[%s456] ss:$2 sm:$0xff] %v452
      %v458 = vld.sshfl [vmem:[#allocation1] sm:$0xff pattern:$0x75316420]
      %v459 = vld.sshfl [vmem:[#allocation1 + $0x8] sm:$0xff pattern:$0x75316420]
      %v460 = vld.sshfl [vmem:[#allocation1 + $0x10] sm:$0xff pattern:$0x75316420]
      %461 = vrot.lane.b32.xlu0 %v458, 111
      %v462 = vpop.permute.xlu0 %461
      %463 = vrot.lane.b32.xlu0 %v459, 111
      %v464 = vpop.permute.xlu0 %463
      %465 = vrot.lane.b32.xlu0 %v460, 111
      %v466 = vpop.permute.xlu0 %465
      %vm467 = vcmask 908288
      %v468 = vsel %vm467, %v462, %v464
      %v469 = vsel %vm467, %v464, %v466
      %v472 = vsel %vm310, %v468, 0.0
      %v473 = vsel %vm311, %v469, 0.0
      %v476 = vrot.slane %v472, 4
      %v477 = vrot.slane %v473, 4
      %480 = vst [vmem:[#allocation3 + $0x20] sm:$0xf0] %v476
      %481 = vst [vmem:[#allocation3 + $0x28] sm:$0xf0] %v477
      %v482 = vld [vmem:[%s1] sm:$0xf]
      %v483 = vld [vmem:[#allocation3] sm:$0xff]
      %v484 = vld [vmem:[#allocation3 + $0x8] sm:$0xff]
      %v485 = vld [vmem:[#allocation3 + $0x10] sm:$0xff]
      %v486 = vld [vmem:[#allocation3 + $0x18] sm:$0xff]
      %v487 = vld [vmem:[#allocation3 + $0x20] sm:$0xff]
      %v488 = vld [vmem:[#allocation3 + $0x28] sm:$0xff]
      %v489 = vld [vmem:[#allocation2] sm:$0xff]
      %v490 = vld [vmem:[#allocation2 + $0x8] sm:$0xf]
      %v491 = vld [vmem:[%s2] sm:$0xf]
      %494 = vst [vmem:[#allocation1] ss:$2 sm:$0xff] %v489
      %s495 = scalar_lea.vmem [#allocation1], 16
      %496 = vst [vmem:[%s495] ss:$2 sm:$0xff] %v490
      %v497 = vld.sshfl [vmem:[#allocation1] sm:$0xff pattern:$0x75316420]
      %v498 = vld.sshfl [vmem:[#allocation1 + $0x8] sm:$0xff pattern:$0x75316420]
      %v499 = vld.sshfl [vmem:[#allocation1 + $0x10] sm:$0xff pattern:$0x75316420]
      %500 = vrot.lane.b32.xlu0 %v497, 16
      %v501 = vpop.permute.xlu0 %500
      %502 = vrot.lane.b32.xlu0 %v498, 16
      %v503 = vpop.permute.xlu0 %502
      %504 = vrot.lane.b32.xlu0 %v499, 16
      %v505 = vpop.permute.xlu0 %504
      %vm506 = vcmask 130048
      %v507 = vsel %vm506, %v501, %v503
      %v508 = vsel %vm506, %v503, %v505
      %vm509 = vcmask 31744
      %v511 = vsel %vm509, %v491, 0
      %vm513 = vcmask 1043456
      %v514 = vsel %vm513, %v507, 0
      %v516 = vsel %vm513, %v508, 0
      %518 = vmatpush.msra.mxu0 0.0
      %519 = vmatpush.msra.mxu0 0.0
      %520 = vmatpush.msra.mxu0 0.0
      %521 = vmatpush.msra.mxu0 0.0
      %522 = vmatpush.msra.mxu0 0.0
      %523 = vmatpush.msra.mxu0 0.0
      %524 = vmatpush.msra.mxu0 0.0
      %525 = vmatpush.msra.mxu0 0.0
      %526 = vmatpush.msra.mxu0 0.0
      %527 = vmatpush.msra.mxu0 0.0
      %528 = vmatpush.msra.mxu0 0.0
      %529 = vmatpush.msra.mxu0 0.0
      %530 = vmatpush.msra.mxu0 0.0
      %531 = vmatpush.msra.mxu0 0.0
      %532 = vmatpush.msra.mxu0 0.0
      %533 = vmatpush.msra.mxu0 %v514
      %534 = vmatmul.f32.gmra.mxu0 %v511
      %v535 = vpop.f32.mrf.mxu0
      %v536 = vadd.f32 0.0, %v535
      %537 = vdwg.mxu0
      %538 = vmatpush.msra.mxu0 0.0
      %539 = vmatpush.msra.mxu0 0.0
      %540 = vmatpush.msra.mxu0 0.0
      %541 = vmatpush.msra.mxu0 0.0
      %542 = vmatpush.msra.mxu0 0.0
      %543 = vmatpush.msra.mxu0 0.0
      %544 = vmatpush.msra.mxu0 0.0
      %545 = vmatpush.msra.mxu0 0.0
      %546 = vmatpush.msra.mxu0 0.0
      %547 = vmatpush.msra.mxu0 0.0
      %548 = vmatpush.msra.mxu0 0.0
      %549 = vmatpush.msra.mxu0 0.0
      %550 = vmatpush.msra.mxu0 0.0
      %551 = vmatpush.msra.mxu0 0.0
      %552 = vmatpush.msra.mxu0 0.0
      %553 = vmatpush.msra.mxu0 %v516
      %554 = vmatmul.f32.gmra.mxu0 %v511
      %v555 = vpop.f32.mrf.mxu0
      %v556 = vadd.f32 0.0, %v555
      %557 = vdwg.mxu0
      %vm558 = vcmask 195584
      %v560 = vsel %vm558, %v482, 0
      %562 = vmatpush.msra.mxu0 0.0
      %563 = vmatpush.msra.mxu0 0.0
      %564 = vmatpush.msra.mxu0 0.0
      %565 = vmatpush.msra.mxu0 0.0
      %566 = vmatpush.msra.mxu0 0.0
      %567 = vmatpush.msra.mxu0 0.0
      %568 = vmatpush.msra.mxu0 0.0
      %569 = vmatpush.msra.mxu0 0.0
      %570 = vmatpush.msra.mxu0 0.0
      %571 = vmatpush.msra.mxu0 0.0
      %572 = vmatpush.msra.mxu0 0.0
      %573 = vmatpush.msra.mxu0 0.0
      %574 = vmatpush.msra.mxu0 0.0
      %575 = vmatpush.msra.mxu0 %v487
      %576 = vmatpush.msra.mxu0 %v485
      %577 = vmatpush.msra.mxu0 %v483
      %578 = vmatmul.f32.gmra.mxu0 %v560
      %v579 = vpop.f32.mrf.mxu0
      %v580 = vadd.f32 %v536, %v579
      %581 = vdwg.mxu0
      %582 = vmatpush.msra.mxu0 0.0
      %583 = vmatpush.msra.mxu0 0.0
      %584 = vmatpush.msra.mxu0 0.0
      %585 = vmatpush.msra.mxu0 0.0
      %586 = vmatpush.msra.mxu0 0.0
      %587 = vmatpush.msra.mxu0 0.0
      %588 = vmatpush.msra.mxu0 0.0
      %589 = vmatpush.msra.mxu0 0.0
      %590 = vmatpush.msra.mxu0 0.0
      %591 = vmatpush.msra.mxu0 0.0
      %592 = vmatpush.msra.mxu0 0.0
      %593 = vmatpush.msra.mxu0 0.0
      %594 = vmatpush.msra.mxu0 0.0
      %595 = vmatpush.msra.mxu0 %v488
      %596 = vmatpush.msra.mxu0 %v486
      %597 = vmatpush.msra.mxu0 %v484
      %598 = vmatmul.f32.gmra.mxu0 %v560
      %v599 = vpop.f32.mrf.mxu0
      %v600 = vadd.f32 %v556, %v599
      %601 = vdwg.mxu0
      %v602 = vld [vmem:[#allocation2 + $0x4] sm:$0xff]
      %s603 = scalar_lea.vmem %s2, 4
      %v604 = vld [vmem:[%s603] sm:$0xf]
      %606 = vst [vmem:[#allocation1] ss:$2 sm:$0xff] %v602
      %v607 = vld.sshfl [vmem:[#allocation1] sm:$0xff pattern:$0x75316420]
      %v608 = vld.sshfl [vmem:[#allocation1 + $0x8] sm:$0xff pattern:$0x75316420]
      %v610 = vsel %vm509, %v604, 0
      %v612 = vsel %vm513, %v607, 0
      %v614 = vsel %vm513, %v608, 0
      %616 = vmatpush.msra.mxu0 0.0
      %617 = vmatpush.msra.mxu0 0.0
      %618 = vmatpush.msra.mxu0 0.0
      %619 = vmatpush.msra.mxu0 0.0
      %620 = vmatpush.msra.mxu0 0.0
      %621 = vmatpush.msra.mxu0 0.0
      %622 = vmatpush.msra.mxu0 0.0
      %623 = vmatpush.msra.mxu0 0.0
      %624 = vmatpush.msra.mxu0 0.0
      %625 = vmatpush.msra.mxu0 0.0
      %626 = vmatpush.msra.mxu0 0.0
      %627 = vmatpush.msra.mxu0 0.0
      %628 = vmatpush.msra.mxu0 0.0
      %629 = vmatpush.msra.mxu0 0.0
      %630 = vmatpush.msra.mxu0 0.0
      %631 = vmatpush.msra.mxu0 %v612
      %632 = vmatmul.f32.gmra.mxu0 %v610
      %v633 = vpop.f32.mrf.mxu0
      %v634 = vadd.f32 0.0, %v633
      %635 = vdwg.mxu0
      %636 = vmatpush.msra.mxu0 0.0
      %637 = vmatpush.msra.mxu0 0.0
      %638 = vmatpush.msra.mxu0 0.0
      %639 = vmatpush.msra.mxu0 0.0
      %640 = vmatpush.msra.mxu0 0.0
      %641 = vmatpush.msra.mxu0 0.0
      %642 = vmatpush.msra.mxu0 0.0
      %643 = vmatpush.msra.mxu0 0.0
      %644 = vmatpush.msra.mxu0 0.0
      %645 = vmatpush.msra.mxu0 0.0
      %646 = vmatpush.msra.mxu0 0.0
      %647 = vmatpush.msra.mxu0 0.0
      %648 = vmatpush.msra.mxu0 0.0
      %649 = vmatpush.msra.mxu0 0.0
      %650 = vmatpush.msra.mxu0 0.0
      %651 = vmatpush.msra.mxu0 %v614
      %652 = vmatmul.f32.gmra.mxu0 %v610
      %v653 = vpop.f32.mrf.mxu0
      %v654 = vadd.f32 0.0, %v653
      %655 = vdwg.mxu0
      %v656 = vadd.f32 %v580, %v634
      %v657 = vadd.f32 %v600, %v654
      %v658 = vld [vmem:[#allocation2 + $0x4] sm:$0xff]
      %v659 = vld [vmem:[#allocation2 + $0xc] sm:$0xf]
      %s660 = scalar_lea.vmem %s2, 8
      %v661 = vld [vmem:[%s660] sm:$0xf]
      %664 = vst [vmem:[#allocation1] ss:$2 sm:$0xff] %v658
      %s665 = scalar_lea.vmem [#allocation1], 16
      %666 = vst [vmem:[%s665] ss:$2 sm:$0xff] %v659
      %v667 = vld.sshfl [vmem:[#allocation1] sm:$0xff pattern:$0x75316420]
      %v668 = vld.sshfl [vmem:[#allocation1 + $0x8] sm:$0xff pattern:$0x75316420]
      %v669 = vld.sshfl [vmem:[#allocation1 + $0x10] sm:$0xff pattern:$0x75316420]
      %670 = vrot.lane.b32.xlu0 %v667, 112
      %v671 = vpop.permute.xlu0 %670
      %672 = vrot.lane.b32.xlu0 %v668, 112
      %v673 = vpop.permute.xlu0 %672
      %674 = vrot.lane.b32.xlu0 %v669, 112
      %v675 = vpop.permute.xlu0 %674
      %vm676 = vcmask 916480
      %v677 = vsel %vm676, %v671, %v673
      %v678 = vsel %vm676, %v673, %v675
      %v680 = vsel %vm509, %v661, 0
      %v682 = vsel %vm513, %v677, 0
      %v684 = vsel %vm513, %v678, 0
      %686 = vmatpush.msra.mxu0 0.0
      %687 = vmatpush.msra.mxu0 0.0
      %688 = vmatpush.msra.mxu0 0.0
      %689 = vmatpush.msra.mxu0 0.0
      %690 = vmatpush.msra.mxu0 0.0
      %691 = vmatpush.msra.mxu0 0.0
      %692 = vmatpush.msra.mxu0 0.0
      %693 = vmatpush.msra.mxu0 0.0
      %694 = vmatpush.msra.mxu0 0.0
      %695 = vmatpush.msra.mxu0 0.0
      %696 = vmatpush.msra.mxu0 0.0
      %697 = vmatpush.msra.mxu0 0.0
      %698 = vmatpush.msra.mxu0 0.0
      %699 = vmatpush.msra.mxu0 0.0
      %700 = vmatpush.msra.mxu0 0.0
      %701 = vmatpush.msra.mxu0 %v682
      %702 = vmatmul.f32.gmra.mxu0 %v680
      %v703 = vpop.f32.mrf.mxu0
      %v704 = vadd.f32 0.0, %v703
      %705 = vdwg.mxu0
      %706 = vmatpush.msra.mxu0 0.0
      %707 = vmatpush.msra.mxu0 0.0
      %708 = vmatpush.msra.mxu0 0.0
      %709 = vmatpush.msra.mxu0 0.0
      %710 = vmatpush.msra.mxu0 0.0
      %711 = vmatpush.msra.mxu0 0.0
      %712 = vmatpush.msra.mxu0 0.0
      %713 = vmatpush.msra.mxu0 0.0
      %714 = vmatpush.msra.mxu0 0.0
      %715 = vmatpush.msra.mxu0 0.0
      %716 = vmatpush.msra.mxu0 0.0
      %717 = vmatpush.msra.mxu0 0.0
      %718 = vmatpush.msra.mxu0 0.0
      %719 = vmatpush.msra.mxu0 0.0
      %720 = vmatpush.msra.mxu0 0.0
      %721 = vmatpush.msra.mxu0 %v684
      %722 = vmatmul.f32.gmra.mxu0 %v680
      %v723 = vpop.f32.mrf.mxu0
      %v724 = vadd.f32 0.0, %v723
      %725 = vdwg.mxu0
      %v726 = vadd.f32 %v656, %v704
      %v727 = vadd.f32 %v657, %v724
      %v728 = vld [vmem:[%s3] sm:$0xf]
      %730 = vset.pattern.permute.xlu0 0
      %731 = vperm.xlu0 %730, %v728
      %v732 = vpop.permute.xlu0 %731
      %v734 = vadd.f32 %v726, %v732
      %v735 = vadd.f32 %v727, %v732
      %v736 = vmax.f32 %v734, 0.0
      %v737 = vmax.f32 %v735, 0.0
      %v740 = vrot.slane %v737, 4
      %v741 = vsel %vm513, %v736, %v740
      %743 = vst [vmem:[#allocation2 + $0x4] sm:$0xff] %v741
      %v744 = vld [vmem:[#allocation2] sm:$0xff]
      %v745 = vld [vmem:[#allocation2 + $0x8] sm:$0xf]
      %748 = vst [vmem:[#allocation1] ss:$2 sm:$0xff] %v744
      %s749 = scalar_lea.vmem [#allocation1], 16
      %750 = vst [vmem:[%s749] ss:$2 sm:$0xff] %v745
      %v751 = vld.sshfl [vmem:[#allocation1] sm:$0xff pattern:$0x75316420]
      %v752 = vld.sshfl [vmem:[#allocation1 + $0x8] sm:$0xff pattern:$0x75316420]
      %v753 = vld.sshfl [vmem:[#allocation1 + $0x10] sm:$0xff pattern:$0x75316420]
      %754 = vrot.lane.b32.xlu0 %v751, 17
      %v755 = vpop.permute.xlu0 %754
      %756 = vrot.lane.b32.xlu0 %v752, 17
      %v757 = vpop.permute.xlu0 %756
      %758 = vrot.lane.b32.xlu0 %v753, 17
      %v759 = vpop.permute.xlu0 %758
      %v760 = vsel %vm330, %v755, %v757
      %v761 = vsel %vm330, %v757, %v759
      %v764 = vsel %vm308, %v760, 0.0
      %v765 = vsel %vm309, %v761, 0.0
      %766 = vst [vmem:[#allocation3] sm:$0xf] %v764
      %767 = vst [vmem:[#allocation3 + $0x8] sm:$0xf] %v765
      %v768 = vld [vmem:[#allocation2] sm:$0xff]
      %v769 = vld [vmem:[#allocation2 + $0x8] sm:$0xf]
      %772 = vst [vmem:[#allocation1] ss:$2 sm:$0xff] %v768
      %s773 = scalar_lea.vmem [#allocation1], 16
      %774 = vst [vmem:[%s773] ss:$2 sm:$0xff] %v769
      %v775 = vld.sshfl [vmem:[#allocation1] sm:$0xff pattern:$0x75316420]
      %v776 = vld.sshfl [vmem:[#allocation1 + $0x8] sm:$0xff pattern:$0x75316420]
      %v777 = vld.sshfl [vmem:[#allocation1 + $0x10] sm:$0xff pattern:$0x75316420]
      %778 = vrot.lane.b32.xlu0 %v775, 15
      %v779 = vpop.permute.xlu0 %778
      %780 = vrot.lane.b32.xlu0 %v776, 15
      %v781 = vpop.permute.xlu0 %780
      %782 = vrot.lane.b32.xlu0 %v777, 15
      %v783 = vpop.permute.xlu0 %782
      %v784 = vsel %vm355, %v779, %v781
      %v785 = vsel %vm355, %v781, %v783
      %v788 = vsel %vm310, %v784, 0.0
      %v789 = vsel %vm311, %v785, 0.0
      %v792 = vrot.slane %v788, 4
      %v793 = vrot.slane %v789, 4
      %796 = vst [vmem:[#allocation3] sm:$0xf0] %v792
      %797 = vst [vmem:[#allocation3 + $0x8] sm:$0xf0] %v793
      %v798 = vld [vmem:[#allocation2] sm:$0xff]
      %v799 = vld [vmem:[#allocation2 + $0x8] sm:$0xf]
      %802 = vst [vmem:[#allocation1] ss:$2 sm:$0xff] %v798
      %s803 = scalar_lea.vmem [#allocation1], 16
      %804 = vst [vmem:[%s803] ss:$2 sm:$0xff] %v799
      %v805 = vld.sshfl [vmem:[#allocation1] sm:$0xff pattern:$0x75316420]
      %v806 = vld.sshfl [vmem:[#allocation1 + $0x8] sm:$0xff pattern:$0x75316420]
      %v807 = vld.sshfl [vmem:[#allocation1 + $0x10] sm:$0xff pattern:$0x75316420]
      %808 = vrot.lane.b32.xlu0 %v805, 1
      %v809 = vpop.permute.xlu0 %808
      %810 = vrot.lane.b32.xlu0 %v806, 1
      %v811 = vpop.permute.xlu0 %810
      %812 = vrot.lane.b32.xlu0 %v807, 1
      %v813 = vpop.permute.xlu0 %812
      %v814 = vsel %vm386, %v809, %v811
      %v815 = vsel %vm386, %v811, %v813
      %v818 = vsel %vm308, %v814, 0.0
      %v819 = vsel %vm309, %v815, 0.0
      %820 = vst [vmem:[#allocation3 + $0x10] sm:$0xf] %v818
      %821 = vst [vmem:[#allocation3 + $0x18] sm:$0xf] %v819
      %v822 = vld [vmem:[#allocation2 + $0x4] sm:$0xff]
      %v823 = vld [vmem:[#allocation2 + $0xc] sm:$0xf]
      %826 = vst [vmem:[#allocation1] ss:$2 sm:$0xff] %v822
      %s827 = scalar_lea.vmem [#allocation1], 16
      %828 = vst [vmem:[%s827] ss:$2 sm:$0xff] %v823
      %v829 = vld.sshfl [vmem:[#allocation1] sm:$0xff pattern:$0x75316420]
      %v830 = vld.sshfl [vmem:[#allocation1 + $0x8] sm:$0xff pattern:$0x75316420]
      %v831 = vld.sshfl [vmem:[#allocation1 + $0x10] sm:$0xff pattern:$0x75316420]
      %832 = vrot.lane.b32.xlu0 %v829, 127
      %v833 = vpop.permute.xlu0 %832
      %834 = vrot.lane.b32.xlu0 %v830, 127
      %v835 = vpop.permute.xlu0 %834
      %836 = vrot.lane.b32.xlu0 %v831, 127
      %v837 = vpop.permute.xlu0 %836
      %v838 = vsel %vm411, %v833, %v835
      %v839 = vsel %vm411, %v835, %v837
      %v842 = vsel %vm310, %v838, 0.0
      %v843 = vsel %vm311, %v839, 0.0
      %v846 = vrot.slane %v842, 4
      %v847 = vrot.slane %v843, 4
      %850 = vst [vmem:[#allocation3 + $0x10] sm:$0xf0] %v846
      %851 = vst [vmem:[#allocation3 + $0x18] sm:$0xf0] %v847
      %v852 = vld [vmem:[#allocation2 + $0x4] sm:$0xff]
      %v853 = vld [vmem:[#allocation2 + $0xc] sm:$0xf]
      %856 = vst [vmem:[#allocation1] ss:$2 sm:$0xff] %v852
      %s857 = scalar_lea.vmem [#allocation1], 16
      %858 = vst [vmem:[%s857] ss:$2 sm:$0xff] %v853
      %v859 = vld.sshfl [vmem:[#allocation1] sm:$0xff pattern:$0x75316420]
      %v860 = vld.sshfl [vmem:[#allocation1 + $0x8] sm:$0xff pattern:$0x75316420]
      %v861 = vld.sshfl [vmem:[#allocation1 + $0x10] sm:$0xff pattern:$0x75316420]
      %862 = vrot.lane.b32.xlu0 %v859, 113
      %v863 = vpop.permute.xlu0 %862
      %864 = vrot.lane.b32.xlu0 %v860, 113
      %v865 = vpop.permute.xlu0 %864
      %866 = vrot.lane.b32.xlu0 %v861, 113
      %v867 = vpop.permute.xlu0 %866
      %v868 = vsel %vm442, %v863, %v865
      %v869 = vsel %vm442, %v865, %v867
      %v872 = vsel %vm308, %v868, 0.0
      %v873 = vsel %vm309, %v869, 0.0
      %874 = vst [vmem:[#allocation3 + $0x20] sm:$0xf] %v872
      %875 = vst [vmem:[#allocation3 + $0x28] sm:$0xf] %v873
      %v876 = vld [vmem:[#allocation2 + $0x4] sm:$0xff]
      %v877 = vld [vmem:[#allocation2 + $0xc] sm:$0xf]
      %880 = vst [vmem:[#allocation1] ss:$2 sm:$0xff] %v876
      %s881 = scalar_lea.vmem [#allocation1], 16
      %882 = vst [vmem:[%s881] ss:$2 sm:$0xff] %v877
      %v883 = vld.sshfl [vmem:[#allocation1] sm:$0xff pattern:$0x75316420]
      %v884 = vld.sshfl [vmem:[#allocation1 + $0x8] sm:$0xff pattern:$0x75316420]
      %v885 = vld.sshfl [vmem:[#allocation1 + $0x10] sm:$0xff pattern:$0x75316420]
      %886 = vrot.lane.b32.xlu0 %v883, 111
      %v887 = vpop.permute.xlu0 %886
      %888 = vrot.lane.b32.xlu0 %v884, 111
      %v889 = vpop.permute.xlu0 %888
      %890 = vrot.lane.b32.xlu0 %v885, 111
      %v891 = vpop.permute.xlu0 %890
      %v892 = vsel %vm467, %v887, %v889
      %v893 = vsel %vm467, %v889, %v891
      %v896 = vsel %vm310, %v892, 0.0
      %v897 = vsel %vm311, %v893, 0.0
      %v900 = vrot.slane %v896, 4
      %v901 = vrot.slane %v897, 4
      %904 = vst [vmem:[#allocation3 + $0x20] sm:$0xf0] %v900
      %905 = vst [vmem:[#allocation3 + $0x28] sm:$0xf0] %v901
      %v906 = vld [vmem:[%s4] sm:$0xf]
      %v907 = vld [vmem:[#allocation3] sm:$0xff]
      %v908 = vld [vmem:[#allocation3 + $0x8] sm:$0xff]
      %v909 = vld [vmem:[#allocation3 + $0x10] sm:$0xff]
      %v910 = vld [vmem:[#allocation3 + $0x18] sm:$0xff]
      %v911 = vld [vmem:[#allocation3 + $0x20] sm:$0xff]
      %v912 = vld [vmem:[#allocation3 + $0x28] sm:$0xff]
      %v913 = vld [vmem:[#allocation2] sm:$0xff]
      %v914 = vld [vmem:[#allocation2 + $0x8] sm:$0xf]
      %v915 = vld [vmem:[%s5] sm:$0xf]
      %918 = vst [vmem:[#allocation1] ss:$2 sm:$0xff] %v913
      %s919 = scalar_lea.vmem [#allocation1], 16
      %920 = vst [vmem:[%s919] ss:$2 sm:$0xff] %v914
      %v921 = vld.sshfl [vmem:[#allocation1] sm:$0xff pattern:$0x75316420]
      %v922 = vld.sshfl [vmem:[#allocation1 + $0x8] sm:$0xff pattern:$0x75316420]
      %v923 = vld.sshfl [vmem:[#allocation1 + $0x10] sm:$0xff pattern:$0x75316420]
      %924 = vrot.lane.b32.xlu0 %v921, 16
      %v925 = vpop.permute.xlu0 %924
      %926 = vrot.lane.b32.xlu0 %v922, 16
      %v927 = vpop.permute.xlu0 %926
      %928 = vrot.lane.b32.xlu0 %v923, 16
      %v929 = vpop.permute.xlu0 %928
      %v930 = vsel %vm506, %v925, %v927
      %v931 = vsel %vm506, %v927, %v929
      %v933 = vsel %vm509, %v915, 0
      %v935 = vsel %vm513, %v930, 0
      %v937 = vsel %vm513, %v931, 0
      %939 = vmatpush.msra.mxu0 0.0
      %940 = vmatpush.msra.mxu0 0.0
      %941 = vmatpush.msra.mxu0 0.0
      %942 = vmatpush.msra.mxu0 0.0
      %943 = vmatpush.msra.mxu0 0.0
      %944 = vmatpush.msra.mxu0 0.0
      %945 = vmatpush.msra.mxu0 0.0
      %946 = vmatpush.msra.mxu0 0.0
      %947 = vmatpush.msra.mxu0 0.0
      %948 = vmatpush.msra.mxu0 0.0
      %949 = vmatpush.msra.mxu0 0.0
      %950 = vmatpush.msra.mxu0 0.0
      %951 = vmatpush.msra.mxu0 0.0
      %952 = vmatpush.msra.mxu0 0.0
      %953 = vmatpush.msra.mxu0 0.0
      %954 = vmatpush.msra.mxu0 %v935
      %955 = vmatmul.f32.gmra.mxu0 %v933
      %v956 = vpop.f32.mrf.mxu0
      %v957 = vadd.f32 0.0, %v956
      %958 = vdwg.mxu0
      %959 = vmatpush.msra.mxu0 0.0
      %960 = vmatpush.msra.mxu0 0.0
      %961 = vmatpush.msra.mxu0 0.0
      %962 = vmatpush.msra.mxu0 0.0
      %963 = vmatpush.msra.mxu0 0.0
      %964 = vmatpush.msra.mxu0 0.0
      %965 = vmatpush.msra.mxu0 0.0
      %966 = vmatpush.msra.mxu0 0.0
      %967 = vmatpush.msra.mxu0 0.0
      %968 = vmatpush.msra.mxu0 0.0
      %969 = vmatpush.msra.mxu0 0.0
      %970 = vmatpush.msra.mxu0 0.0
      %971 = vmatpush.msra.mxu0 0.0
      %972 = vmatpush.msra.mxu0 0.0
      %973 = vmatpush.msra.mxu0 0.0
      %974 = vmatpush.msra.mxu0 %v937
      %975 = vmatmul.f32.gmra.mxu0 %v933
      %v976 = vpop.f32.mrf.mxu0
      %v977 = vadd.f32 0.0, %v976
      %978 = vdwg.mxu0
      %v980 = vsel %vm558, %v906, 0
      %982 = vmatpush.msra.mxu0 0.0
      %983 = vmatpush.msra.mxu0 0.0
      %984 = vmatpush.msra.mxu0 0.0
      %985 = vmatpush.msra.mxu0 0.0
      %986 = vmatpush.msra.mxu0 0.0
      %987 = vmatpush.msra.mxu0 0.0
      %988 = vmatpush.msra.mxu0 0.0
      %989 = vmatpush.msra.mxu0 0.0
      %990 = vmatpush.msra.mxu0 0.0
      %991 = vmatpush.msra.mxu0 0.0
      %992 = vmatpush.msra.mxu0 0.0
      %993 = vmatpush.msra.mxu0 0.0
      %994 = vmatpush.msra.mxu0 0.0
      %995 = vmatpush.msra.mxu0 %v911
      %996 = vmatpush.msra.mxu0 %v909
      %997 = vmatpush.msra.mxu0 %v907
      %998 = vmatmul.f32.gmra.mxu0 %v980
      %v999 = vpop.f32.mrf.mxu0
      %v1000 = vadd.f32 %v957, %v999
      %1001 = vdwg.mxu0
      %1002 = vmatpush.msra.mxu0 0.0
      %1003 = vmatpush.msra.mxu0 0.0
      %1004 = vmatpush.msra.mxu0 0.0
      %1005 = vmatpush.msra.mxu0 0.0
      %1006 = vmatpush.msra.mxu0 0.0
      %1007 = vmatpush.msra.mxu0 0.0
      %1008 = vmatpush.msra.mxu0 0.0
      %1009 = vmatpush.msra.mxu0 0.0
      %1010 = vmatpush.msra.mxu0 0.0
      %1011 = vmatpush.msra.mxu0 0.0
      %1012 = vmatpush.msra.mxu0 0.0
      %1013 = vmatpush.msra.mxu0 0.0
      %1014 = vmatpush.msra.mxu0 0.0
      %1015 = vmatpush.msra.mxu0 %v912
      %1016 = vmatpush.msra.mxu0 %v910
      %1017 = vmatpush.msra.mxu0 %v908
      %1018 = vmatmul.f32.gmra.mxu0 %v980
      %v1019 = vpop.f32.mrf.mxu0
      %v1020 = vadd.f32 %v977, %v1019
      %1021 = vdwg.mxu0
      %v1022 = vld [vmem:[#allocation2 + $0x4] sm:$0xff]
      %s1023 = scalar_lea.vmem %s5, 4
      %v1024 = vld [vmem:[%s1023] sm:$0xf]
      %1026 = vst [vmem:[#allocation1] ss:$2 sm:$0xff] %v1022
      %v1027 = vld.sshfl [vmem:[#allocation1] sm:$0xff pattern:$0x75316420]
      %v1028 = vld.sshfl [vmem:[#allocation1 + $0x8] sm:$0xff pattern:$0x75316420]
      %v1030 = vsel %vm509, %v1024, 0
      %v1032 = vsel %vm513, %v1027, 0
      %v1034 = vsel %vm513, %v1028, 0
      %1036 = vmatpush.msra.mxu0 0.0
      %1037 = vmatpush.msra.mxu0 0.0
      %1038 = vmatpush.msra.mxu0 0.0
      %1039 = vmatpush.msra.mxu0 0.0
      %1040 = vmatpush.msra.mxu0 0.0
      %1041 = vmatpush.msra.mxu0 0.0
      %1042 = vmatpush.msra.mxu0 0.0
      %1043 = vmatpush.msra.mxu0 0.0
      %1044 = vmatpush.msra.mxu0 0.0
      %1045 = vmatpush.msra.mxu0 0.0
      %1046 = vmatpush.msra.mxu0 0.0
      %1047 = vmatpush.msra.mxu0 0.0
      %1048 = vmatpush.msra.mxu0 0.0
      %1049 = vmatpush.msra.mxu0 0.0
      %1050 = vmatpush.msra.mxu0 0.0
      %1051 = vmatpush.msra.mxu0 %v1032
      %1052 = vmatmul.f32.gmra.mxu0 %v1030
      %v1053 = vpop.f32.mrf.mxu0
      %v1054 = vadd.f32 0.0, %v1053
      %1055 = vdwg.mxu0
      %1056 = vmatpush.msra.mxu0 0.0
      %1057 = vmatpush.msra.mxu0 0.0
      %1058 = vmatpush.msra.mxu0 0.0
      %1059 = vmatpush.msra.mxu0 0.0
      %1060 = vmatpush.msra.mxu0 0.0
      %1061 = vmatpush.msra.mxu0 0.0
      %1062 = vmatpush.msra.mxu0 0.0
      %1063 = vmatpush.msra.mxu0 0.0
      %1064 = vmatpush.msra.mxu0 0.0
      %1065 = vmatpush.msra.mxu0 0.0
      %1066 = vmatpush.msra.mxu0 0.0
      %1067 = vmatpush.msra.mxu0 0.0
      %1068 = vmatpush.msra.mxu0 0.0
      %1069 = vmatpush.msra.mxu0 0.0
      %1070 = vmatpush.msra.mxu0 0.0
      %1071 = vmatpush.msra.mxu0 %v1034
      %1072 = vmatmul.f32.gmra.mxu0 %v1030
      %v1073 = vpop.f32.mrf.mxu0
      %v1074 = vadd.f32 0.0, %v1073
      %1075 = vdwg.mxu0
      %v1076 = vadd.f32 %v1000, %v1054
      %v1077 = vadd.f32 %v1020, %v1074
      %v1078 = vld [vmem:[#allocation2 + $0x4] sm:$0xff]
      %v1079 = vld [vmem:[#allocation2 + $0xc] sm:$0xf]
      %s1080 = scalar_lea.vmem %s5, 8
      %v1081 = vld [vmem:[%s1080] sm:$0xf]
      %1084 = vst [vmem:[#allocation1] ss:$2 sm:$0xff] %v1078
      %s1085 = scalar_lea.vmem [#allocation1], 16
      %1086 = vst [vmem:[%s1085] ss:$2 sm:$0xff] %v1079
      %v1087 = vld.sshfl [vmem:[#allocation1] sm:$0xff pattern:$0x75316420]
      %v1088 = vld.sshfl [vmem:[#allocation1 + $0x8] sm:$0xff pattern:$0x75316420]
      %v1089 = vld.sshfl [vmem:[#allocation1 + $0x10] sm:$0xff pattern:$0x75316420]
      %1090 = vrot.lane.b32.xlu0 %v1087, 112
      %v1091 = vpop.permute.xlu0 %1090
      %1092 = vrot.lane.b32.xlu0 %v1088, 112
      %v1093 = vpop.permute.xlu0 %1092
      %1094 = vrot.lane.b32.xlu0 %v1089, 112
      %v1095 = vpop.permute.xlu0 %1094
      %v1096 = vsel %vm676, %v1091, %v1093
      %v1097 = vsel %vm676, %v1093, %v1095
      %v1099 = vsel %vm509, %v1081, 0
      %v1101 = vsel %vm513, %v1096, 0
      %v1103 = vsel %vm513, %v1097, 0
      %1105 = vmatpush.msra.mxu0 0.0
      %1106 = vmatpush.msra.mxu0 0.0
      %1107 = vmatpush.msra.mxu0 0.0
      %1108 = vmatpush.msra.mxu0 0.0
      %1109 = vmatpush.msra.mxu0 0.0
      %1110 = vmatpush.msra.mxu0 0.0
      %1111 = vmatpush.msra.mxu0 0.0
      %1112 = vmatpush.msra.mxu0 0.0
      %1113 = vmatpush.msra.mxu0 0.0
      %1114 = vmatpush.msra.mxu0 0.0
      %1115 = vmatpush.msra.mxu0 0.0
      %1116 = vmatpush.msra.mxu0 0.0
      %1117 = vmatpush.msra.mxu0 0.0
      %1118 = vmatpush.msra.mxu0 0.0
      %1119 = vmatpush.msra.mxu0 0.0
      %1120 = vmatpush.msra.mxu0 %v1101
      %1121 = vmatmul.f32.gmra.mxu0 %v1099
      %v1122 = vpop.f32.mrf.mxu0
      %v1123 = vadd.f32 0.0, %v1122
      %1124 = vdwg.mxu0
      %1125 = vmatpush.msra.mxu0 0.0
      %1126 = vmatpush.msra.mxu0 0.0
      %1127 = vmatpush.msra.mxu0 0.0
      %1128 = vmatpush.msra.mxu0 0.0
      %1129 = vmatpush.msra.mxu0 0.0
      %1130 = vmatpush.msra.mxu0 0.0
      %1131 = vmatpush.msra.mxu0 0.0
      %1132 = vmatpush.msra.mxu0 0.0
      %1133 = vmatpush.msra.mxu0 0.0
      %1134 = vmatpush.msra.mxu0 0.0
      %1135 = vmatpush.msra.mxu0 0.0
      %1136 = vmatpush.msra.mxu0 0.0
      %1137 = vmatpush.msra.mxu0 0.0
      %1138 = vmatpush.msra.mxu0 0.0
      %1139 = vmatpush.msra.mxu0 0.0
      %1140 = vmatpush.msra.mxu0 %v1103
      %1141 = vmatmul.f32.gmra.mxu0 %v1099
      %v1142 = vpop.f32.mrf.mxu0
      %v1143 = vadd.f32 0.0, %v1142
      %1144 = vdwg.mxu0
      %v1145 = vadd.f32 %v1076, %v1123
      %v1146 = vadd.f32 %v1077, %v1143
      %v1147 = vld [vmem:[%s6] sm:$0xf]
      %1149 = vset.pattern.permute.xlu0 0
      %1150 = vperm.xlu0 %1149, %v1147
      %v1151 = vpop.permute.xlu0 %1150
      %v1153 = vadd.f32 %v1145, %v1151
      %v1154 = vadd.f32 %v1146, %v1151
      %v1155 = vld [vmem:[%s273] sm:$0xff]
      %1157 = vst [vmem:[#allocation1] ss:$2 sm:$0xff] %v1155
      %v1158 = vld.sshfl [vmem:[#allocation1] sm:$0xff pattern:$0x75316420]
      %v1159 = vld.sshfl [vmem:[#allocation1 + $0x8] sm:$0xff pattern:$0x75316420]
      %v1162 = vadd.f32 %v1153, %v1158
      %v1163 = vadd.f32 %v1154, %v1159
      %v1164 = vmax.f32 %v1162, 0.0
      %v1165 = vmax.f32 %v1163, 0.0
      %v1168 = vrot.slane %v1165, 4
      %v1169 = vsel %vm513, %v1164, %v1168
      %1171 = vst [vmem:[%s278] sm:$0xff] %v1169
      %p1172 = scmp.lt.s32.totalorder %s18, 1
      %s1173 = scalar_select %p1172, %s18, 1
      %s1174 = smul.addr %s1173, 2
      %s1175 = smul.addr %s1174, 4
      %s1176 = scalar_lea.vmem %s7, %s1175
      // Predicated region
      $region49: #{resnet_basicblock.1} parent=47 // pred_check
        %p1177 = pneg %p188
      $region50: #{resnet_basicblock.1} parent=47 // pred_check_branch
        %1179 = sbr.rel (%p1177) target = $region52
      $region51: #{resnet_basicblock.1} parent=47 // pred_region
        _
      $region52: #{resnet_basicblock.1} parent=47 // pred_fallthru
        _
    $region48: #{resnet_basicblock.1} parent=5 // pred_fallthru
      _
    %p1180 = scmp.le.s32.totalorder 2, %s13
    // Predicated region
    $region53: #{resnet_basicblock.1} parent=5 // pred_check
      %p1181 = pneg %p1180
    $region54: #{resnet_basicblock.1} parent=5 // pred_check_branch
      %1183 = sbr.rel (%p1181) target = $region56
    $region55: #{resnet_basicblock.1} parent=5 // pred_region
      %s1184 = ssub.s32 %s13, 2
      // Predicated region
      $region57: #{resnet_basicblock.1} parent=55 // pred_check
        %p1185 = pneg %p194
      $region58: #{resnet_basicblock.1} parent=55 // pred_check_branch
        %1187 = sbr.rel (%p1185) target = $region60
      $region59: #{resnet_basicblock.1} parent=55 // pred_region
        %p1188 = scmp.lt.s32.totalorder %s19, 1
        %s1189 = scalar_select %p1188, %s19, 1
        %s1190 = smul.addr %s1189, 2
        %s1191 = smul.addr %s1190, 4
        %s1192 = scalar_lea.vmem %s7, %s1191
      $region60: #{resnet_basicblock.1} parent=55 // pred_fallthru
        _
    $region56: #{resnet_basicblock.1} parent=5 // pred_fallthru
      _
  $region6: #{resnet_basicblock.1} parent=0 // loop_footer
    %s17 = sadd.s32 1, %s13
  $region7: #{resnet_basicblock.1} parent=0 // loop_footer_branch
    %12 = sbr.rel target = $region3
  $region8: #{resnet_basicblock.1} parent=0 // loop_exit
    _

</llo_original>
